<compile_context>
chip_gen: v7x
topology: tpu7x:2x2x1
jax: 0.10.0
libtpu: 0.0.40
codegen_flags: <defaults>
</compile_context>

<pallas_src>
import functools

import jax
import jax.numpy as jnp
from jax import lax
from jax.experimental import pallas as pl
from jax.experimental.pallas import tpu as pltpu


_VMEM = pl.BlockSpec(memory_space=pltpu.MemorySpace.VMEM)


# --------------------------- Pallas kernels ---------------------------------

def _mlp2_kernel(x_ref, w1_ref, b1_ref, w2_ref, b2_ref, o_ref):
    # x: (M, K), w1: (K, H), b1: (1, H), w2: (H, N), b2: (1, N) -> o: (M, N)
    x = x_ref[...]
    h = jnp.dot(x, w1_ref[...], preferred_element_type=jnp.float32) + b1_ref[...]
    h = jnp.maximum(h, 0.0)
    o_ref[...] = jnp.dot(h, w2_ref[...], preferred_element_type=jnp.float32) + b2_ref[...]


def mlp2(x, w1, b1, w2, b2):
    """Fused 2-layer MLP (Linear -> ReLU -> Linear), one Pallas call, rows batched."""
    x = jnp.asarray(x, jnp.float32)
    M = x.shape[0]
    N = w2.shape[1]
    return pl.pallas_call(
        _mlp2_kernel,
        out_shape=jax.ShapeDtypeStruct((M, N), jnp.float32),
        in_specs=[_VMEM] * 5,
        out_specs=_VMEM,
    )(x, w1, b1.reshape(1, -1), w2, b2.reshape(1, -1))


def _prep_kernel(score_ref, para_ref, video_ref, q_ref, texts_ref, btn_ref,
                 w1v_ref, w1t_ref, w1q_ref, w1b_ref, b1_ref, o_ref):
    # score: (P,1) raw; para: (P,Tt); video: (P,Tv); q: (1,Tt);
    # texts: (S*A,Tt); btn: (S*A,Tv); w1*: feature-block slices of mlp_pre.fc1
    # out: (S*A, H1) = fc1 pre-activations for every (step, action).
    s = score_ref[...]
    s = s - jnp.max(s, axis=0, keepdims=True)
    e = jnp.exp(s)
    p = e * pl.reciprocal(jnp.sum(e, axis=0, keepdims=True), approx=True)   # (P,1)
    # softmax-weighted pooling on the VPU (broadcast-mul + sublane row-sum)
    text_seg = jnp.sum(p * para_ref[...], axis=0, keepdims=True)            # (1,Tt)
    video_seg = jnp.sum(p * video_ref[...], axis=0, keepdims=True)          # (1,Tv)
    # step-invariant contribution to mlp_pre.fc1 (video_seg | text_seg | question)
    const = (b1_ref[...]
             + jnp.dot(video_seg, w1v_ref[...], preferred_element_type=jnp.float32)
             + jnp.dot(text_seg, w1t_ref[...], preferred_element_type=jnp.float32)
             + jnp.dot(q_ref[...], w1q_ref[...], preferred_element_type=jnp.float32))
    # per-(step, action) contributions (qa = question + a_text handled algebraically)
    o_ref[...] = (const
                  + jnp.dot(texts_ref[...], w1q_ref[...], preferred_element_type=jnp.float32)
                  + jnp.dot(btn_ref[...], w1b_ref[...], preferred_element_type=jnp.float32))


def _step_kernel(pre1_ref, state0_ref, w2pre_ref, b2pre_ref,
                 w1p_in_ref, w1p_st_ref, b1p_ref, w2p_ref, b2p_ref,
                 o_ref, state_scr):
    # Transposed (feature x action) orientation.
    #   pre1:   (H1, A)  fc1 pre-activation of mlp_pre for this step
    #   state0: (D, 1)   initial history state
    #   w2pre:  (D, H1)  mlp_pre.fc2 (torch layout), b2pre: (D,1)
    #   w1p_in/w1p_st: (Hp, D) proj.fc1 split for [inputs | state], b1p: (Hp,1)
    #   w2p: (1, Hp), b2p: (1,1)
    #   out:    (1, A) logits row (lane-dense)
    @pl.when(pl.program_id(0) == 0)
    def _():
        state_scr[...] = state0_ref[...]

    z1 = jnp.maximum(pre1_ref[...], 0.0)                                        # (H1,A)
    inp = (jnp.dot(w2pre_ref[...], z1, preferred_element_type=jnp.float32)
           + b2pre_ref[...])                                                    # (D, A)
    z2 = (jnp.dot(w1p_in_ref[...], inp, preferred_element_type=jnp.float32)
          + jnp.dot(w1p_st_ref[...], state_scr[...], preferred_element_type=jnp.float32)
          + b1p_ref[...])
    z2 = jnp.maximum(z2, 0.0)                                                   # (Hp,A)
    logits = (jnp.dot(w2p_ref[...], z2, preferred_element_type=jnp.float32)
              + b2p_ref[...])                                                   # (1, A)
    o_ref[...] = logits

    # history_val == 'max': state <- inputs[argmax(logits)]  (first max, like torch)
    A = logits.shape[1]
    lane = lax.broadcasted_iota(jnp.int32, (1, A), 1).astype(jnp.float32)
    m = jnp.max(logits, axis=1, keepdims=True)
    first = jnp.min(jnp.where(logits >= m, lane, float(A)), axis=1, keepdims=True)
    onehot = (lane == first).astype(jnp.float32)                                # (1, A)
    state_scr[...] = jnp.sum(inp * onehot, axis=1, keepdims=True)               # (D, 1)


def step_scan(pre1_T, state0_col, sp, S, A):
    D = state0_col.shape[0]
    H1 = pre1_T.shape[1]
    Hp = sp["w1p_in"].shape[0]
    out = pl.pallas_call(
        _step_kernel,
        out_shape=jax.ShapeDtypeStruct((S, 1, A), jnp.float32),
        grid=(S,),
        in_specs=[
            pl.BlockSpec((None, H1, A), lambda i: (i, 0, 0)),   # per-step pre1 (H1,A)
            pl.BlockSpec((D, 1), lambda i: (0, 0)),             # state0 (resident)
            pl.BlockSpec((D, H1), lambda i: (0, 0)),            # mlp_pre.fc2
            pl.BlockSpec((D, 1), lambda i: (0, 0)),
            pl.BlockSpec((Hp, D), lambda i: (0, 0)),            # proj.fc1 (inputs part)
            pl.BlockSpec((Hp, D), lambda i: (0, 0)),            # proj.fc1 (state part)
            pl.BlockSpec((Hp, 1), lambda i: (0, 0)),
            pl.BlockSpec((1, Hp), lambda i: (0, 0)),            # proj.fc2
            pl.BlockSpec((1, 1), lambda i: (0, 0)),
        ],
        out_specs=pl.BlockSpec((None, 1, A), lambda i: (i, 0, 0)),
        scratch_shapes=[pltpu.VMEM((D, 1), jnp.float32)],        # carried state
        compiler_params=pltpu.CompilerParams(dimension_semantics=("arbitrary",)),
    )(pre1_T, state0_col, sp["w2pre"], sp["b2pre"],
      sp["w1p_in"], sp["w1p_st"], sp["b1p"], sp["w2p"], sp["b2p"])
    return out.reshape(S, A)


# --------------------------- Parameter setup --------------------------------

def _linear_params(key, fan_in, fan_out):
    kw, kb = jax.random.split(key)
    bound = 1.0 / jnp.sqrt(fan_in)
    w = jax.random.uniform(kw, (fan_in, fan_out), jnp.float32, -bound, bound)  # [in,out]
    b = jax.random.uniform(kb, (fan_out,), jnp.float32, -bound, bound)
    return w, b


def make_mlp1_params(key, in_f, out_f):
    # MLP1: Linear(in, in) -> ReLU -> Linear(in, out)
    k1, k2 = jax.random.split(key)
    w1, b1 = _linear_params(k1, in_f, in_f)
    w2, b2 = _linear_params(k2, in_f, out_f)
    return (w1, b1, w2, b2)


def make_mlp_params(key, in_f, out_f):
    # MLP: Linear(in, 4*in) -> ReLU -> Linear(4*in, out)
    k1, k2 = jax.random.split(key)
    w1, b1 = _linear_params(k1, in_f, 4 * in_f)
    w2, b2 = _linear_params(k2, 4 * in_f, out_f)
    return (w1, b1, w2, b2)


def prepare_step_params(params, cfg):
    """Pre-slice / pre-transpose mlp_pre and proj weights for the fused step kernels."""
    VIS_OUT, TXT_OUT, D = cfg["VISUAL_OUT"], cfg["TEXT_OUT"], cfg["DIM_STATE"]
    w1, b1, w2, b2 = params["mlp_pre"]        # w1: (IN_PRE, H1), w2: (H1, D)
    w1p, b1p, w2p, b2p = params["proj"]       # w1p: (2D, Hp),   w2p: (Hp, 1)
    return {
        # feature-block split of mlp_pre.fc1 (input order: video_seg|text_seg|qa|buttons)
        "w1v": w1[:VIS_OUT],
        "w1t": w1[VIS_OUT:VIS_OUT + TXT_OUT],
        "w1q": w1[VIS_OUT + TXT_OUT:VIS_OUT + 2 * TXT_OUT],
        "w1b": w1[VIS_OUT + 2 * TXT_OUT:],
        "b1pre": b1.reshape(1, -1),
        # transposed layouts for the (feature x action) step kernel
        "w2pre": w2.T,                        # (D, H1)
        "b2pre": b2.reshape(-1, 1),           # (D, 1)
        "w1p_in": w1p[:D].T,                  # (Hp, D)
        "w1p_st": w1p[D:].T,                  # (Hp, D)
        "b1p": b1p.reshape(-1, 1),            # (Hp, 1)
        "w2p": w2p.T,                         # (1, Hp)
        "b2p": b2p.reshape(1, 1),             # (1, 1)
    }


# --------------------------- Forward (eval) ----------------------------------

@functools.partial(jax.jit, static_argnames=("S", "A"))
def episode_forward(tparams, vparams, sparams, state0_col,
                    video, para, question, texts_all, buttons_all, score_col, *, S, A):
    P = para.shape[0]
    T = video.shape[0]

    # 1) one batched text MLP for para + question + every step's action texts
    t_out = mlp2(jnp.concatenate([para, question, texts_all], axis=0), *tparams)
    para_o = t_out[:P]
    question_o = t_out[P:P + 1]
    texts_o = t_out[P + 1:]

    # 2) one batched visual MLP for video rows + every step's buttons
    v_out = mlp2(jnp.concatenate([video, buttons_all], axis=0), *vparams)
    video_o = v_out[:T]
    btn_o = v_out[T:]

    # 3) fused seg pooling + step-invariant mlp_pre.fc1 pre-activations
    H1 = sparams["b1pre"].shape[1]
    pre1 = pl.pallas_call(
        _prep_kernel,
        out_shape=jax.ShapeDtypeStruct((S * A, H1), jnp.float32),
        in_specs=[_VMEM] * 11,
        out_specs=_VMEM,
    )(score_col, para_o, video_o, question_o, texts_o, btn_o,
      sparams["w1v"], sparams["w1t"], sparams["w1q"], sparams["w1b"], sparams["b1pre"])

    # 4) sequential action-step scan (state carried in VMEM scratch), lane-dense logits
    pre1_T = jnp.transpose(pre1.reshape(S, A, H1), (0, 2, 1))   # (S, H1, A)
    return step_scan(pre1_T, state0_col, sparams, S, A)          # (S, A)


def q2a_function_blip_forward(params, state_init, batch, cfg):
    sparams = prepare_step_params(params, cfg)
    state0_col = state_init.reshape(-1, 1)
    VIS_DIM = cfg["VISUAL_DIM"]

    results = []
    for (video, script, question, para, actions, label, meta) in batch:
        S = len(actions)
        A = len(actions[0])
        # TODO(synk): assumes A is constant across steps of an episode (true here);
        # ragged A would need per-step padding + masking.
        texts_all = jnp.concatenate(
            [a["text"] for step in actions for a in step], axis=0)            # (S*A, TD)
        buttons_all = jnp.concatenate(
            [a["button"].reshape(-1, VIS_DIM) for step in actions for a in step], axis=0)
        score_col = jnp.asarray(meta["paras_score"], jnp.float32).reshape(-1, 1)
        # egovlp path: the score-weighted video pooling requires T == P
        assert video.shape[0] == score_col.shape[0]

        logits = episode_forward(params["mlp_t"], params["mlp_v"], sparams, state0_col,
                                 video, para, question, texts_all, buttons_all,
                                 score_col, S=S, A=A)                          # (S, A)

        meta_out = dict(meta)
        meta_out["scores"] = [logits[i] for i in range(S)]
        results.append(meta_out)
    # TODO(synk): training branch (cross-entropy loss), 'gru' history arch, and the
    # non-egovlp timestamp pooling branch are not implemented (eval + mlp + egovlp only).
    return results


# ------------------------------ Main -----------------------------------------

if __name__ == "__main__":
    cfg = dict(VISUAL_DIM=32, VISUAL_OUT=16, TEXT_DIM=24, TEXT_OUT=16, DIM_STATE=32)
    IN_PRE = cfg["VISUAL_OUT"] * 2 + cfg["TEXT_OUT"] * 2

    root = jax.random.PRNGKey(0)
    k_v, k_t, k_p, k_j, k_s, k_data = jax.random.split(root, 6)

    params = {
        "mlp_v":   make_mlp1_params(k_v, cfg["VISUAL_DIM"], cfg["VISUAL_OUT"]),
        "mlp_t":   make_mlp1_params(k_t, cfg["TEXT_DIM"], cfg["TEXT_OUT"]),
        "mlp_pre": make_mlp1_params(k_p, IN_PRE, cfg["DIM_STATE"]),
        "proj":    make_mlp_params(k_j, cfg["DIM_STATE"] * 2, 1),
    }
    state_init = jax.random.normal(k_s, (cfg["DIM_STATE"],), jnp.float32)

    # synthetic episode data: P paras == T video rows (egovlp), S action steps, A actions
    P, T, S, A = 4, 4, 2, 3
    n_episodes = 2
    batch = []
    dkeys = jax.random.split(k_data, n_episodes)
    for e in range(n_episodes):
        ks = jax.random.split(dkeys[e], 8)
        video = jax.random.normal(ks[0], (T, cfg["VISUAL_DIM"]), jnp.float32)
        script = jax.random.normal(ks[1], (P, cfg["TEXT_DIM"]), jnp.float32)
        question = jax.random.normal(ks[2], (1, cfg["TEXT_DIM"]), jnp.float32)
        para = jax.random.normal(ks[3], (P, cfg["TEXT_DIM"]), jnp.float32)
        actions = []
        akeys = jax.random.split(ks[4], S)
        for s in range(S):
            step_keys = jax.random.split(akeys[s], 2 * A)
            actions.append([
                {"text": jax.random.normal(step_keys[2 * a], (1, cfg["TEXT_DIM"]), jnp.float32),
                 "button": jax.random.normal(step_keys[2 * a + 1], (1, cfg["VISUAL_DIM"]), jnp.float32)}
                for a in range(A)
            ])
        label = jnp.zeros((S,), jnp.int32)  # unused in eval
        meta = {
            "paras_score": [float(x) for x in jax.random.normal(ks[5], (P,))],
            "paras_timestamp": [[i, i + 1] for i in range(P)],  # unused (egovlp=True)
            "hand_score": None,
        }
        batch.append((video, script, question, para, actions, label, meta))

    results = q2a_function_blip_forward(params, state_init, batch, cfg)

    for r in results:
        for s in r["scores"]:
            jax.block_until_ready(s)

    print("KERNEL_OK")
</pallas_src>

<mosaic_0001>
module attributes {stable_mosaic.version = 11 : i64} {
  func.func @_prep_kernel(%arg0: memref<4x1xf32, #tpu.memory_space<vmem>>, %arg1: memref<4x16xf32, #tpu.memory_space<vmem>>, %arg2: memref<4x16xf32, #tpu.memory_space<vmem>>, %arg3: memref<1x16xf32, #tpu.memory_space<vmem>>, %arg4: memref<6x16xf32, #tpu.memory_space<vmem>>, %arg5: memref<6x16xf32, #tpu.memory_space<vmem>>, %arg6: memref<16x64xf32, #tpu.memory_space<vmem>>, %arg7: memref<16x64xf32, #tpu.memory_space<vmem>>, %arg8: memref<16x64xf32, #tpu.memory_space<vmem>>, %arg9: memref<16x64xf32, #tpu.memory_space<vmem>>, %arg10: memref<1x64xf32, #tpu.memory_space<vmem>>, %arg11: memref<6x64xf32, #tpu.memory_space<vmem>>) attributes {dimension_semantics = [], scalar_prefetch = 0 : i64, scratch_operands = 0 : i64, tpu.core_type = #tpu.core_type<tc>} {
    %c0 = arith.constant 0 : index
    %c0_0 = arith.constant 0 : index
    %0 = vector.load %arg0[%c0, %c0_0] : memref<4x1xf32, #tpu.memory_space<vmem>>, vector<4x1xf32>
    %cst = arith.constant dense<0xFF800000> : vector<1xf32>
    %1 = vector.multi_reduction <maximumf>, %0, %cst [0] : vector<4x1xf32> to vector<1xf32>
    %2 = vector.shape_cast %1 : vector<1xf32> to vector<1x1xf32>
    %3 = vector.broadcast %2 : vector<1x1xf32> to vector<4x1xf32>
    %4 = arith.subf %0, %3 : vector<4x1xf32>
    %5 = math.exp %4 : vector<4x1xf32>
    %cst_1 = arith.constant dense<0.000000e+00> : vector<1xf32>
    %6 = vector.multi_reduction <add>, %5, %cst_1 [0] : vector<4x1xf32> to vector<1xf32>
    %7 = vector.shape_cast %6 : vector<1xf32> to vector<1x1xf32>
    %8 = tpu.reciprocal %7 {approx = true} : vector<1x1xf32> -> vector<1x1xf32>
    %9 = vector.broadcast %8 : vector<1x1xf32> to vector<4x1xf32>
    %10 = arith.mulf %5, %9 : vector<4x1xf32>
    %c0_2 = arith.constant 0 : index
    %c0_3 = arith.constant 0 : index
    %11 = vector.load %arg1[%c0_2, %c0_3] : memref<4x16xf32, #tpu.memory_space<vmem>>, vector<4x16xf32>
    %12 = vector.broadcast %10 : vector<4x1xf32> to vector<4x16xf32>
    %13 = arith.mulf %12, %11 : vector<4x16xf32>
    %cst_4 = arith.constant dense<0.000000e+00> : vector<16xf32>
    %14 = vector.multi_reduction <add>, %13, %cst_4 [0] : vector<4x16xf32> to vector<16xf32>
    %15 = vector.shape_cast %14 : vector<16xf32> to vector<1x16xf32>
    %c0_5 = arith.constant 0 : index
    %c0_6 = arith.constant 0 : index
    %16 = vector.load %arg2[%c0_5, %c0_6] : memref<4x16xf32, #tpu.memory_space<vmem>>, vector<4x16xf32>
    %17 = vector.broadcast %10 : vector<4x1xf32> to vector<4x16xf32>
    %18 = arith.mulf %17, %16 : vector<4x16xf32>
    %cst_7 = arith.constant dense<0.000000e+00> : vector<16xf32>
    %19 = vector.multi_reduction <add>, %18, %cst_7 [0] : vector<4x16xf32> to vector<16xf32>
    %20 = vector.shape_cast %19 : vector<16xf32> to vector<1x16xf32>
    %c0_8 = arith.constant 0 : index
    %c0_9 = arith.constant 0 : index
    %21 = vector.load %arg10[%c0_8, %c0_9] : memref<1x64xf32, #tpu.memory_space<vmem>>, vector<1x64xf32>
    %c0_10 = arith.constant 0 : index
    %c0_11 = arith.constant 0 : index
    %22 = vector.load %arg6[%c0_10, %c0_11] : memref<16x64xf32, #tpu.memory_space<vmem>>, vector<16x64xf32>
    %cst_12 = arith.constant dense<0.000000e+00> : vector<1x64xf32>
    %23 = tpu.matmul %20, %22, %cst_12 {dimension_numbers = #tpu.dot_dimension_numbers<[1], [0], [0], [1], [0, 0, 1, 1], [], []>} : vector<1x16xf32>, vector<16x64xf32>, vector<1x64xf32> -> vector<1x64xf32>
    %24 = arith.addf %21, %23 : vector<1x64xf32>
    %c0_13 = arith.constant 0 : index
    %c0_14 = arith.constant 0 : index
    %25 = vector.load %arg7[%c0_13, %c0_14] : memref<16x64xf32, #tpu.memory_space<vmem>>, vector<16x64xf32>
    %cst_15 = arith.constant dense<0.000000e+00> : vector<1x64xf32>
    %26 = tpu.matmul %15, %25, %cst_15 {dimension_numbers = #tpu.dot_dimension_numbers<[1], [0], [0], [1], [0, 0, 1, 1], [], []>} : vector<1x16xf32>, vector<16x64xf32>, vector<1x64xf32> -> vector<1x64xf32>
    %27 = arith.addf %24, %26 : vector<1x64xf32>
    %c0_16 = arith.constant 0 : index
    %c0_17 = arith.constant 0 : index
    %28 = vector.load %arg3[%c0_16, %c0_17] : memref<1x16xf32, #tpu.memory_space<vmem>>, vector<1x16xf32>
    %c0_18 = arith.constant 0 : index
    %c0_19 = arith.constant 0 : index
    %29 = vector.load %arg8[%c0_18, %c0_19] : memref<16x64xf32, #tpu.memory_space<vmem>>, vector<16x64xf32>
    %cst_20 = arith.constant dense<0.000000e+00> : vector<1x64xf32>
    %30 = tpu.matmul %28, %29, %cst_20 {dimension_numbers = #tpu.dot_dimension_numbers<[1], [0], [0], [1], [0, 0, 1, 1], [], []>} : vector<1x16xf32>, vector<16x64xf32>, vector<1x64xf32> -> vector<1x64xf32>
    %31 = arith.addf %27, %30 : vector<1x64xf32>
    %c0_21 = arith.constant 0 : index
    %c0_22 = arith.constant 0 : index
    %32 = vector.load %arg4[%c0_21, %c0_22] : memref<6x16xf32, #tpu.memory_space<vmem>>, vector<6x16xf32>
    %c0_23 = arith.constant 0 : index
    %c0_24 = arith.constant 0 : index
    %33 = vector.load %arg8[%c0_23, %c0_24] : memref<16x64xf32, #tpu.memory_space<vmem>>, vector<16x64xf32>
    %cst_25 = arith.constant dense<0.000000e+00> : vector<6x64xf32>
    %34 = tpu.matmul %32, %33, %cst_25 {dimension_numbers = #tpu.dot_dimension_numbers<[1], [0], [0], [1], [0, 0, 1, 1], [], []>} : vector<6x16xf32>, vector<16x64xf32>, vector<6x64xf32> -> vector<6x64xf32>
    %35 = vector.broadcast %31 : vector<1x64xf32> to vector<6x64xf32>
    %36 = arith.addf %35, %34 : vector<6x64xf32>
    %c0_26 = arith.constant 0 : index
    %c0_27 = arith.constant 0 : index
    %37 = vector.load %arg5[%c0_26, %c0_27] : memref<6x16xf32, #tpu.memory_space<vmem>>, vector<6x16xf32>
    %c0_28 = arith.constant 0 : index
    %c0_29 = arith.constant 0 : index
    %38 = vector.load %arg9[%c0_28, %c0_29] : memref<16x64xf32, #tpu.memory_space<vmem>>, vector<16x64xf32>
    %cst_30 = arith.constant dense<0.000000e+00> : vector<6x64xf32>
    %39 = tpu.matmul %37, %38, %cst_30 {dimension_numbers = #tpu.dot_dimension_numbers<[1], [0], [0], [1], [0, 0, 1, 1], [], []>} : vector<6x16xf32>, vector<16x64xf32>, vector<6x64xf32> -> vector<6x64xf32>
    %40 = arith.addf %36, %39 : vector<6x64xf32>
    %c0_31 = arith.constant 0 : index
    %c0_32 = arith.constant 0 : index
    %41 = vector.load %arg11[%c0_31, %c0_32] : memref<6x64xf32, #tpu.memory_space<vmem>>, vector<6x64xf32>
    tpu.vector_store %arg11[%c0_31, %c0_32], %40 {strides = array<i32>} : memref<6x64xf32, #tpu.memory_space<vmem>>, vector<6x64xf32>,
    return
  }
}

module attributes {stable_mosaic.version = 11 : i64} {
  func.func @_mlp2_kernel(%arg0: memref<11x24xf32, #tpu.memory_space<vmem>>, %arg1: memref<24x24xf32, #tpu.memory_space<vmem>>, %arg2: memref<1x24xf32, #tpu.memory_space<vmem>>, %arg3: memref<24x16xf32, #tpu.memory_space<vmem>>, %arg4: memref<1x16xf32, #tpu.memory_space<vmem>>, %arg5: memref<11x16xf32, #tpu.memory_space<vmem>>) attributes {dimension_semantics = [], scalar_prefetch = 0 : i64, scratch_operands = 0 : i64, tpu.core_type = #tpu.core_type<tc>} {
    %c0 = arith.constant 0 : index
    %c0_0 = arith.constant 0 : index
    %0 = vector.load %arg0[%c0, %c0_0] : memref<11x24xf32, #tpu.memory_space<vmem>>, vector<11x24xf32>
    %c0_1 = arith.constant 0 : index
    %c0_2 = arith.constant 0 : index
    %1 = vector.load %arg1[%c0_1, %c0_2] : memref<24x24xf32, #tpu.memory_space<vmem>>, vector<24x24xf32>
    %cst = arith.constant dense<0.000000e+00> : vector<11x24xf32>
    %2 = tpu.matmul %0, %1, %cst {dimension_numbers = #tpu.dot_dimension_numbers<[1], [0], [0], [1], [0, 0, 1, 1], [], []>} : vector<11x24xf32>, vector<24x24xf32>, vector<11x24xf32> -> vector<11x24xf32>
    %c0_3 = arith.constant 0 : index
    %c0_4 = arith.constant 0 : index
    %3 = vector.load %arg2[%c0_3, %c0_4] : memref<1x24xf32, #tpu.memory_space<vmem>>, vector<1x24xf32>
    %4 = vector.broadcast %3 : vector<1x24xf32> to vector<11x24xf32>
    %5 = arith.addf %2, %4 : vector<11x24xf32>
    %cst_5 = arith.constant 0.000000e+00 : f32
    %6 = vector.broadcast %cst_5 : f32 to vector<11x24xf32>
    %7 = arith.maximumf %5, %6 : vector<11x24xf32>
    %c0_6 = arith.constant 0 : index
    %c0_7 = arith.constant 0 : index
    %8 = vector.load %arg3[%c0_6, %c0_7] : memref<24x16xf32, #tpu.memory_space<vmem>>, vector<24x16xf32>
    %cst_8 = arith.constant dense<0.000000e+00> : vector<11x16xf32>
    %9 = tpu.matmul %7, %8, %cst_8 {dimension_numbers = #tpu.dot_dimension_numbers<[1], [0], [0], [1], [0, 0, 1, 1], [], []>} : vector<11x24xf32>, vector<24x16xf32>, vector<11x16xf32> -> vector<11x16xf32>
    %c0_9 = arith.constant 0 : index
    %c0_10 = arith.constant 0 : index
    %10 = vector.load %arg4[%c0_9, %c0_10] : memref<1x16xf32, #tpu.memory_space<vmem>>, vector<1x16xf32>
    %11 = vector.broadcast %10 : vector<1x16xf32> to vector<11x16xf32>
    %12 = arith.addf %9, %11 : vector<11x16xf32>
    %c0_11 = arith.constant 0 : index
    %c0_12 = arith.constant 0 : index
    %13 = vector.load %arg5[%c0_11, %c0_12] : memref<11x16xf32, #tpu.memory_space<vmem>>, vector<11x16xf32>
    tpu.vector_store %arg5[%c0_11, %c0_12], %12 {strides = array<i32>} : memref<11x16xf32, #tpu.memory_space<vmem>>, vector<11x16xf32>,
    return
  }
}

module attributes {stable_mosaic.version = 11 : i64} {
  func.func @_mlp2_kernel(%arg0: memref<10x32xf32, #tpu.memory_space<vmem>>, %arg1: memref<32x32xf32, #tpu.memory_space<vmem>>, %arg2: memref<1x32xf32, #tpu.memory_space<vmem>>, %arg3: memref<32x16xf32, #tpu.memory_space<vmem>>, %arg4: memref<1x16xf32, #tpu.memory_space<vmem>>, %arg5: memref<10x16xf32, #tpu.memory_space<vmem>>) attributes {dimension_semantics = [], scalar_prefetch = 0 : i64, scratch_operands = 0 : i64, tpu.core_type = #tpu.core_type<tc>} {
    %c0 = arith.constant 0 : index
    %c0_0 = arith.constant 0 : index
    %0 = vector.load %arg0[%c0, %c0_0] : memref<10x32xf32, #tpu.memory_space<vmem>>, vector<10x32xf32>
    %c0_1 = arith.constant 0 : index
    %c0_2 = arith.constant 0 : index
    %1 = vector.load %arg1[%c0_1, %c0_2] : memref<32x32xf32, #tpu.memory_space<vmem>>, vector<32x32xf32>
    %cst = arith.constant dense<0.000000e+00> : vector<10x32xf32>
    %2 = tpu.matmul %0, %1, %cst {dimension_numbers = #tpu.dot_dimension_numbers<[1], [0], [0], [1], [0, 0, 1, 1], [], []>} : vector<10x32xf32>, vector<32x32xf32>, vector<10x32xf32> -> vector<10x32xf32>
    %c0_3 = arith.constant 0 : index
    %c0_4 = arith.constant 0 : index
    %3 = vector.load %arg2[%c0_3, %c0_4] : memref<1x32xf32, #tpu.memory_space<vmem>>, vector<1x32xf32>
    %4 = vector.broadcast %3 : vector<1x32xf32> to vector<10x32xf32>
    %5 = arith.addf %2, %4 : vector<10x32xf32>
    %cst_5 = arith.constant 0.000000e+00 : f32
    %6 = vector.broadcast %cst_5 : f32 to vector<10x32xf32>
    %7 = arith.maximumf %5, %6 : vector<10x32xf32>
    %c0_6 = arith.constant 0 : index
    %c0_7 = arith.constant 0 : index
    %8 = vector.load %arg3[%c0_6, %c0_7] : memref<32x16xf32, #tpu.memory_space<vmem>>, vector<32x16xf32>
    %cst_8 = arith.constant dense<0.000000e+00> : vector<10x16xf32>
    %9 = tpu.matmul %7, %8, %cst_8 {dimension_numbers = #tpu.dot_dimension_numbers<[1], [0], [0], [1], [0, 0, 1, 1], [], []>} : vector<10x32xf32>, vector<32x16xf32>, vector<10x16xf32> -> vector<10x16xf32>
    %c0_9 = arith.constant 0 : index
    %c0_10 = arith.constant 0 : index
    %10 = vector.load %arg4[%c0_9, %c0_10] : memref<1x16xf32, #tpu.memory_space<vmem>>, vector<1x16xf32>
    %11 = vector.broadcast %10 : vector<1x16xf32> to vector<10x16xf32>
    %12 = arith.addf %9, %11 : vector<10x16xf32>
    %c0_11 = arith.constant 0 : index
    %c0_12 = arith.constant 0 : index
    %13 = vector.load %arg5[%c0_11, %c0_12] : memref<10x16xf32, #tpu.memory_space<vmem>>, vector<10x16xf32>
    tpu.vector_store %arg5[%c0_11, %c0_12], %12 {strides = array<i32>} : memref<10x16xf32, #tpu.memory_space<vmem>>, vector<10x16xf32>,
    return
  }
}

module attributes {stable_mosaic.version = 11 : i64} {
  func.func @_step_kernel(%arg0: i32, %arg1: memref<1x64x3xf32, #tpu.memory_space<vmem>>, %arg2: memref<32x1xf32, #tpu.memory_space<vmem>>, %arg3: memref<32x64xf32, #tpu.memory_space<vmem>>, %arg4: memref<32x1xf32, #tpu.memory_space<vmem>>, %arg5: memref<256x32xf32, #tpu.memory_space<vmem>>, %arg6: memref<256x32xf32, #tpu.memory_space<vmem>>, %arg7: memref<256x1xf32, #tpu.memory_space<vmem>>, %arg8: memref<1x256xf32, #tpu.memory_space<vmem>>, %arg9: memref<1x1xf32, #tpu.memory_space<vmem>>, %arg10: memref<1x1x3xf32, #tpu.memory_space<vmem>>, %arg11: memref<32x1xf32, #tpu.memory_space<vmem>>) attributes {dimension_semantics = [#tpu.dimension_semantics<arbitrary>], iteration_bounds = array<i64: 2>, scalar_prefetch = 0 : i64, scratch_operands = 1 : i64, tpu.core_type = #tpu.core_type<tc>, window_params = [{transform_indices = @transform_0, window_bounds = array<i64: 1, 64, 3>}, {pipeline_mode = #tpu.pipeline_mode<synchronous>, transform_indices = @transform_1, window_bounds = array<i64: 32, 1>}, {pipeline_mode = #tpu.pipeline_mode<synchronous>, transform_indices = @transform_2, window_bounds = array<i64: 32, 64>}, {pipeline_mode = #tpu.pipeline_mode<synchronous>, transform_indices = @transform_3, window_bounds = array<i64: 32, 1>}, {pipeline_mode = #tpu.pipeline_mode<synchronous>, transform_indices = @transform_4, window_bounds = array<i64: 256, 32>}, {pipeline_mode = #tpu.pipeline_mode<synchronous>, transform_indices = @transform_5, window_bounds = array<i64: 256, 32>}, {pipeline_mode = #tpu.pipeline_mode<synchronous>, transform_indices = @transform_6, window_bounds = array<i64: 256, 1>}, {pipeline_mode = #tpu.pipeline_mode<synchronous>, transform_indices = @transform_7, window_bounds = array<i64: 1, 256>}, {pipeline_mode = #tpu.pipeline_mode<synchronous>, transform_indices = @transform_8, window_bounds = array<i64: 1, 1>}, {transform_indices = @transform_9, window_bounds = array<i64: 1, 1, 3>}]} {
    %c0_i32 = arith.constant 0 : i32
    %0 = arith.cmpi eq, %arg0, %c0_i32 : i32
    %1 = arith.extui %0 : i1 to i32
    %c0_i32_0 = arith.constant 0 : i32
    %2 = arith.cmpi ne, %1, %c0_i32_0 : i32
    scf.if %2 {
      %c0_33 = arith.constant 0 : index
      %c0_34 = arith.constant 0 : index
      %51 = vector.load %arg2[%c0_33, %c0_34] : memref<32x1xf32, #tpu.memory_space<vmem>>, vector<32x1xf32>
      %c0_35 = arith.constant 0 : index
      %c0_36 = arith.constant 0 : index
      %52 = vector.load %arg11[%c0_35, %c0_36] : memref<32x1xf32, #tpu.memory_space<vmem>>, vector<32x1xf32>
      tpu.vector_store %arg11[%c0_35, %c0_36], %51 {strides = array<i32>} : memref<32x1xf32, #tpu.memory_space<vmem>>, vector<32x1xf32>,
    } else {
    }
    %c0 = arith.constant 0 : index
    %c0_1 = arith.constant 0 : index
    %c0_2 = arith.constant 0 : index
    %3 = vector.load %arg1[%c0, %c0_1, %c0_2] : memref<1x64x3xf32, #tpu.memory_space<vmem>>, vector<1x64x3xf32>
    %4 = vector.shape_cast %3 : vector<1x64x3xf32> to vector<64x3xf32>
    %cst = arith.constant 0.000000e+00 : f32
    %5 = vector.broadcast %cst : f32 to vector<64x3xf32>
    %6 = arith.maximumf %4, %5 : vector<64x3xf32>
    %c0_3 = arith.constant 0 : index
    %c0_4 = arith.constant 0 : index
    %7 = vector.load %arg3[%c0_3, %c0_4] : memref<32x64xf32, #tpu.memory_space<vmem>>, vector<32x64xf32>
    %cst_5 = arith.constant dense<0.000000e+00> : vector<32x3xf32>
    %8 = tpu.matmul %7, %6, %cst_5 {dimension_numbers = #tpu.dot_dimension_numbers<[1], [0], [0], [1], [0, 0, 1, 1], [], []>} : vector<32x64xf32>, vector<64x3xf32>, vector<32x3xf32> -> vector<32x3xf32>
    %c0_6 = arith.constant 0 : index
    %c0_7 = arith.constant 0 : index
    %9 = vector.load %arg4[%c0_6, %c0_7] : memref<32x1xf32, #tpu.memory_space<vmem>>, vector<32x1xf32>
    %10 = vector.broadcast %9 : vector<32x1xf32> to vector<32x3xf32>
    %11 = arith.addf %8, %10 : vector<32x3xf32>
    %c0_8 = arith.constant 0 : index
    %c0_9 = arith.constant 0 : index
    %12 = vector.load %arg5[%c0_8, %c0_9] : memref<256x32xf32, #tpu.memory_space<vmem>>, vector<256x32xf32>
    %cst_10 = arith.constant dense<0.000000e+00> : vector<256x3xf32>
    %13 = tpu.matmul %12, %11, %cst_10 {dimension_numbers = #tpu.dot_dimension_numbers<[1], [0], [0], [1], [0, 0, 1, 1], [], []>} : vector<256x32xf32>, vector<32x3xf32>, vector<256x3xf32> -> vector<256x3xf32>
    %c0_11 = arith.constant 0 : index
    %c0_12 = arith.constant 0 : index
    %14 = vector.load %arg6[%c0_11, %c0_12] : memref<256x32xf32, #tpu.memory_space<vmem>>, vector<256x32xf32>
    %c0_13 = arith.constant 0 : index
    %c0_14 = arith.constant 0 : index
    %15 = vector.load %arg11[%c0_13, %c0_14] : memref<32x1xf32, #tpu.memory_space<vmem>>, vector<32x1xf32>
    %cst_15 = arith.constant dense<0.000000e+00> : vector<256x1xf32>
    %16 = tpu.matmul %14, %15, %cst_15 {dimension_numbers = #tpu.dot_dimension_numbers<[1], [0], [0], [1], [0, 0, 1, 1], [], []>} : vector<256x32xf32>, vector<32x1xf32>, vector<256x1xf32> -> vector<256x1xf32>
    %17 = vector.broadcast %16 : vector<256x1xf32> to vector<256x3xf32>
    %18 = arith.addf %13, %17 : vector<256x3xf32>
    %c0_16 = arith.constant 0 : index
    %c0_17 = arith.constant 0 : index
    %19 = vector.load %arg7[%c0_16, %c0_17] : memref<256x1xf32, #tpu.memory_space<vmem>>, vector<256x1xf32>
    %20 = vector.broadcast %19 : vector<256x1xf32> to vector<256x3xf32>
    %21 = arith.addf %18, %20 : vector<256x3xf32>
    %cst_18 = arith.constant 0.000000e+00 : f32
    %22 = vector.broadcast %cst_18 : f32 to vector<256x3xf32>
    %23 = arith.maximumf %21, %22 : vector<256x3xf32>
    %c0_19 = arith.constant 0 : index
    %c0_20 = arith.constant 0 : index
    %24 = vector.load %arg8[%c0_19, %c0_20] : memref<1x256xf32, #tpu.memory_space<vmem>>, vector<1x256xf32>
    %cst_21 = arith.constant dense<0.000000e+00> : vector<1x3xf32>
    %25 = tpu.matmul %24, %23, %cst_21 {dimension_numbers = #tpu.dot_dimension_numbers<[1], [0], [0], [1], [0, 0, 1, 1], [], []>} : vector<1x256xf32>, vector<256x3xf32>, vector<1x3xf32> -> vector<1x3xf32>
    %c0_22 = arith.constant 0 : index
    %c0_23 = arith.constant 0 : index
    %26 = vector.load %arg9[%c0_22, %c0_23] : memref<1x1xf32, #tpu.memory_space<vmem>>, vector<1x1xf32>
    %27 = vector.broadcast %26 : vector<1x1xf32> to vector<1x3xf32>
    %28 = arith.addf %25, %27 : vector<1x3xf32>
    %c0_24 = arith.constant 0 : index
    %c0_25 = arith.constant 0 : index
    %c0_26 = arith.constant 0 : index
    %29 = vector.load %arg10[%c0_24, %c0_25, %c0_26] : memref<1x1x3xf32, #tpu.memory_space<vmem>>, vector<1x1x3xf32>
    %30 = vector.shape_cast %29 : vector<1x1x3xf32> to vector<1x3xf32>
    %31 = vector.shape_cast %28 : vector<1x3xf32> to vector<1x1x3xf32>
    tpu.vector_store %arg10[%c0_24, %c0_25, %c0_26], %31 {strides = array<i32>} : memref<1x1x3xf32, #tpu.memory_space<vmem>>, vector<1x1x3xf32>,
    %32 = tpu.iota {dimensions = array<i32: 1>} : vector<1x3xi32>
    %33 = arith.sitofp %32 : vector<1x3xi32> to vector<1x3xf32>
    %cst_27 = arith.constant dense<0xFF800000> : vector<1xf32>
    %34 = vector.multi_reduction <maximumf>, %28, %cst_27 [1] : vector<1x3xf32> to vector<1xf32>
    %35 = vector.shape_cast %34 : vector<1xf32> to vector<1x1xf32>
    %36 = vector.broadcast %35 : vector<1x1xf32> to vector<1x3xf32>
    %37 = arith.cmpf oge, %28, %36 : vector<1x3xf32>
    %cst_28 = arith.constant 3.000000e+00 : f32
    %38 = vector.broadcast %cst_28 : f32 to vector<1x3xf32>
    %39 = arith.select %37, %33, %38 : vector<1x3xi1>, vector<1x3xf32>
    %cst_29 = arith.constant dense<0x7F800000> : vector<1xf32>
    %40 = vector.multi_reduction <minimumf>, %39, %cst_29 [1] : vector<1x3xf32> to vector<1xf32>
    %41 = vector.shape_cast %40 : vector<1xf32> to vector<1x1xf32>
    %42 = vector.broadcast %41 : vector<1x1xf32> to vector<1x3xf32>
    %43 = arith.cmpf oeq, %33, %42 : vector<1x3xf32>
    %44 = arith.extui %43 : vector<1x3xi1> to vector<1x3xi32>
    %45 = arith.sitofp %44 : vector<1x3xi32> to vector<1x3xf32>
    %46 = vector.broadcast %45 : vector<1x3xf32> to vector<32x3xf32>
    %47 = arith.mulf %11, %46 : vector<32x3xf32>
    %cst_30 = arith.constant dense<0.000000e+00> : vector<32xf32>
    %48 = vector.multi_reduction <add>, %47, %cst_30 [1] : vector<32x3xf32> to vector<32xf32>
    %49 = vector.shape_cast %48 : vector<32xf32> to vector<32x1xf32>
    %c0_31 = arith.constant 0 : index
    %c0_32 = arith.constant 0 : index
    %50 = vector.load %arg11[%c0_31, %c0_32] : memref<32x1xf32, #tpu.memory_space<vmem>>, vector<32x1xf32>
    tpu.vector_store %arg11[%c0_31, %c0_32], %49 {strides = array<i32>} : memref<32x1xf32, #tpu.memory_space<vmem>>, vector<32x1xf32>,
    return
  }
  func.func @transform_0(%arg0: i32) -> (i32, i32, i32) {
    %c0_i32 = arith.constant 0 : i32
    %c0_i32_0 = arith.constant 0 : i32
    %c0_i32_1 = arith.constant 0 : i32
    return %arg0, %c0_i32, %c0_i32_0 : i32, i32, i32
  }
  func.func @transform_1(%arg0: i32) -> (i32, i32) {
    %c0_i32 = arith.constant 0 : i32
    %c0_i32_0 = arith.constant 0 : i32
    %c0_i32_1 = arith.constant 0 : i32
    return %c0_i32, %c0_i32_0 : i32, i32
  }
  func.func @transform_2(%arg0: i32) -> (i32, i32) {
    %c0_i32 = arith.constant 0 : i32
    %c0_i32_0 = arith.constant 0 : i32
    %c0_i32_1 = arith.constant 0 : i32
    return %c0_i32, %c0_i32_0 : i32, i32
  }
  func.func @transform_3(%arg0: i32) -> (i32, i32) {
    %c0_i32 = arith.constant 0 : i32
    %c0_i32_0 = arith.constant 0 : i32
    %c0_i32_1 = arith.constant 0 : i32
    return %c0_i32, %c0_i32_0 : i32, i32
  }
  func.func @transform_4(%arg0: i32) -> (i32, i32) {
    %c0_i32 = arith.constant 0 : i32
    %c0_i32_0 = arith.constant 0 : i32
    %c0_i32_1 = arith.constant 0 : i32
    return %c0_i32, %c0_i32_0 : i32, i32
  }
  func.func @transform_5(%arg0: i32) -> (i32, i32) {
    %c0_i32 = arith.constant 0 : i32
    %c0_i32_0 = arith.constant 0 : i32
    %c0_i32_1 = arith.constant 0 : i32
    return %c0_i32, %c0_i32_0 : i32, i32
  }
  func.func @transform_6(%arg0: i32) -> (i32, i32) {
    %c0_i32 = arith.constant 0 : i32
    %c0_i32_0 = arith.constant 0 : i32
    %c0_i32_1 = arith.constant 0 : i32
    return %c0_i32, %c0_i32_0 : i32, i32
  }
  func.func @transform_7(%arg0: i32) -> (i32, i32) {
    %c0_i32 = arith.constant 0 : i32
    %c0_i32_0 = arith.constant 0 : i32
    %c0_i32_1 = arith.constant 0 : i32
    return %c0_i32, %c0_i32_0 : i32, i32
  }
  func.func @transform_8(%arg0: i32) -> (i32, i32) {
    %c0_i32 = arith.constant 0 : i32
    %c0_i32_0 = arith.constant 0 : i32
    %c0_i32_1 = arith.constant 0 : i32
    return %c0_i32, %c0_i32_0 : i32, i32
  }
  func.func @transform_9(%arg0: i32) -> (i32, i32, i32) {
    %c0_i32 = arith.constant 0 : i32
    %c0_i32_0 = arith.constant 0 : i32
    %c0_i32_1 = arith.constant 0 : i32
    return %arg0, %c0_i32, %c0_i32_0 : i32, i32, i32
  }
}

</mosaic_0001>

<llo_original>
// kernel: episode_forward.6
$region0: #{episode_forward.6}
  #allocation0 [shape = 'u32[]', space=smem, size = 0x4, offset = 0x4, fixed_abs, tag = 'smem constant byte address 0x4 - core index']
  #allocation1 [shape = 'u32[144,128]{1,0:T(1,128)}', space=vmem, size = 0x12000, scoped, tag = 'internal scratch']
  %s0 = inlined_call_operand.vmem [shape: f32[4,1], index: 0, kind: input, shape index: {}]
  %s1 = inlined_call_operand.vmem [shape: f32[4,16], index: 1, kind: input, shape index: {}]
  %s2 = inlined_call_operand.vmem [shape: f32[4,16], index: 2, kind: input, shape index: {}]
  %s3 = inlined_call_operand.vmem [shape: f32[1,16], index: 3, kind: input, shape index: {}]
  %s4 = inlined_call_operand.vmem [shape: f32[6,16], index: 4, kind: input, shape index: {}]
  %s5 = inlined_call_operand.vmem [shape: f32[6,16], index: 5, kind: input, shape index: {}]
  %s6 = inlined_call_operand.vmem [shape: f32[16,64], index: 6, kind: input, shape index: {}]
  %s7 = inlined_call_operand.vmem [shape: f32[16,64], index: 7, kind: input, shape index: {}]
  %s8 = inlined_call_operand.vmem [shape: f32[16,64], index: 8, kind: input, shape index: {}]
  %s9 = inlined_call_operand.vmem [shape: f32[16,64], index: 9, kind: input, shape index: {}]
  %s10 = inlined_call_operand.vmem [shape: f32[1,64], index: 10, kind: input, shape index: {}]
  %s11 = inlined_call_operand.vmem [shape: f32[6,64], index: 11, kind: output, shape index: {}]
  %s12 = sld [smem:[#allocation0]]
  $region54: #{episode_forward.6} parent=0
    _
  %s14 = ssub.s32 1, %s12
  %s15 = scalar_select 0, %s14, %s12
  // Predicated region
  $region2: #{episode_forward.6} parent=0 // pred_check
    _
  $region3: #{episode_forward.6} parent=0 // pred_check_branch
    %17 = sbr.rel (0) target = $region5
  $region4: #{episode_forward.6} parent=0 // pred_region
    _
  $region5: #{episode_forward.6} parent=0 // pred_fallthru
    _
  // Predicated region
  $region6: #{episode_forward.6} parent=0 // pred_check
    _
  $region7: #{episode_forward.6} parent=0 // pred_check_branch
    %19 = sbr.rel (0) target = $region9
  $region8: #{episode_forward.6} parent=0 // pred_region
    _
  $region9: #{episode_forward.6} parent=0 // pred_fallthru
    _
  // Predicated region
  $region10: #{episode_forward.6} parent=0 // pred_check
    _
  $region11: #{episode_forward.6} parent=0 // pred_check_branch
    %21 = sbr.rel (0) target = $region13
  $region12: #{episode_forward.6} parent=0 // pred_region
    _
  $region13: #{episode_forward.6} parent=0 // pred_fallthru
    _
  // Predicated region
  $region14: #{episode_forward.6} parent=0 // pred_check
    _
  $region15: #{episode_forward.6} parent=0 // pred_check_branch
    %23 = sbr.rel (0) target = $region17
  $region16: #{episode_forward.6} parent=0 // pred_region
    _
  $region17: #{episode_forward.6} parent=0 // pred_fallthru
    _
  // Predicated region
  $region18: #{episode_forward.6} parent=0 // pred_check
    _
  $region19: #{episode_forward.6} parent=0 // pred_check_branch
    %25 = sbr.rel (0) target = $region21
  $region20: #{episode_forward.6} parent=0 // pred_region
    _
  $region21: #{episode_forward.6} parent=0 // pred_fallthru
    _
  // Predicated region
  $region22: #{episode_forward.6} parent=0 // pred_check
    _
  $region23: #{episode_forward.6} parent=0 // pred_check_branch
    %27 = sbr.rel (0) target = $region25
  $region24: #{episode_forward.6} parent=0 // pred_region
    _
  $region25: #{episode_forward.6} parent=0 // pred_fallthru
    _
  // Predicated region
  $region26: #{episode_forward.6} parent=0 // pred_check
    _
  $region27: #{episode_forward.6} parent=0 // pred_check_branch
    %29 = sbr.rel (0) target = $region29
  $region28: #{episode_forward.6} parent=0 // pred_region
    _
  $region29: #{episode_forward.6} parent=0 // pred_fallthru
    _
  // Predicated region
  $region30: #{episode_forward.6} parent=0 // pred_check
    _
  $region31: #{episode_forward.6} parent=0 // pred_check_branch
    %31 = sbr.rel (0) target = $region33
  $region32: #{episode_forward.6} parent=0 // pred_region
    _
  $region33: #{episode_forward.6} parent=0 // pred_fallthru
    _
  // Predicated region
  $region34: #{episode_forward.6} parent=0 // pred_check
    _
  $region35: #{episode_forward.6} parent=0 // pred_check_branch
    %33 = sbr.rel (0) target = $region37
  $region36: #{episode_forward.6} parent=0 // pred_region
    _
  $region37: #{episode_forward.6} parent=0 // pred_fallthru
    _
  // Predicated region
  $region38: #{episode_forward.6} parent=0 // pred_check
    _
  $region39: #{episode_forward.6} parent=0 // pred_check_branch
    %35 = sbr.rel (0) target = $region41
  $region40: #{episode_forward.6} parent=0 // pred_region
    _
  $region41: #{episode_forward.6} parent=0 // pred_fallthru
    _
  // Predicated region
  $region42: #{episode_forward.6} parent=0 // pred_check
    _
  $region43: #{episode_forward.6} parent=0 // pred_check_branch
    %37 = sbr.rel (0) target = $region45
  $region44: #{episode_forward.6} parent=0 // pred_region
    _
  $region45: #{episode_forward.6} parent=0 // pred_fallthru
    _
  %v38 = vld [vmem:[%s0] sm:$0xf]
  %vm39 = vcmask 3072
  %v40 = vsel %vm39, %v38, -inf
  %v41 = vrot.slane %v40, 4
  %v42 = vmax.f32 %v40, %v41
  %v43 = vrot.slane %v42, 2
  %v44 = vmax.f32 %v42, %v43
  %v45 = vrot.slane %v44, 1
  %v46 = vmax.f32 %v44, %v45
  %v47 = vsub.f32 %v38, %v46
  %v48 = vmul.f32 %v47, 1.442695
  %v49 = vpow.pop %v48
  %v50 = vsel %vm39, %v49, 0.0
  %v51 = vrot.slane %v50, 4
  %v52 = vadd.f32 %v50, %v51
  %v53 = vrot.slane %v52, 2
  %v54 = vadd.f32 %v52, %v53
  %v55 = vrot.slane %v54, 1
  %v56 = vadd.f32 %v54, %v55
  %v57 = vrcp.pop %v56
  %v58 = vmul.f32 %v49, %v57
  %v59 = vld [vmem:[%s1] sm:$0xf]
  %61 = vset.pattern.permute.xlu0 0
  %62 = vperm.xlu0 %61, %v58
  %v63 = vpop.permute.xlu0 %62
  %v65 = vmul.f32 %v63, %v59
  %vm66 = vcmask 125952
  %v67 = vsel %vm66, %v65, 0.0
  %v68 = vrot.slane %v67, 4
  %v69 = vadd.f32 %v67, %v68
  %v70 = vrot.slane %v69, 2
  %v71 = vadd.f32 %v69, %v70
  %v72 = vrot.slane %v71, 1
  %v73 = vadd.f32 %v71, %v72
  %v74 = vld [vmem:[%s2] sm:$0xf]
  %v75 = vmul.f32 %v63, %v74
  %v76 = vsel %vm66, %v75, 0.0
  %v77 = vrot.slane %v76, 4
  %v78 = vadd.f32 %v76, %v77
  %v79 = vrot.slane %v78, 2
  %v80 = vadd.f32 %v78, %v79
  %v81 = vrot.slane %v80, 1
  %v82 = vadd.f32 %v80, %v81
  %v83 = vld [vmem:[%s10] sm:$0x1]
  %v84 = vld [vmem:[%s6] sm:$0xff]
  %v85 = vld [vmem:[%s6 + $0x8] sm:$0xff]
  %vm86 = vcmask 130048
  %v88 = vsel %vm86, %v82, 0
  %90 = vmatprep.subr.mxu0 0.0
  %91 = vmatpush1.msra.mxu0 %v84
  %92 = vmatprep.subr.mxu0 0.0
  %93 = vmatpush1.msra.mxu0 %v85
  %94 = vmatprep.subr.mxu0 0.0
  %95 = vmatpush1.msra.mxu0 0.0
  %96 = vmatprep.subr.mxu0 0.0
  %97 = vmatpush1.msra.mxu0 0.0
  %98 = vmatprep.subr.mxu0 0.0
  %99 = vmatpush1.msra.mxu0 0.0
  %100 = vmatprep.subr.mxu0 0.0
  %101 = vmatpush1.msra.mxu0 0.0
  %102 = vmatprep.subr.mxu0 0.0
  %103 = vmatpush1.msra.mxu0 0.0
  %104 = vmatprep.subr.mxu0 0.0
  %105 = vmatpush1.msra.mxu0 0.0
  %106 = vmatprep.subr.mxu0 0.0
  %107 = vmatpush1.msra.mxu0 0.0
  %108 = vmatprep.subr.mxu0 0.0
  %109 = vmatpush1.msra.mxu0 0.0
  %110 = vmatprep.subr.mxu0 0.0
  %111 = vmatpush1.msra.mxu0 0.0
  %112 = vmatprep.subr.mxu0 0.0
  %113 = vmatpush1.msra.mxu0 0.0
  %114 = vmatprep.subr.mxu0 0.0
  %115 = vmatpush1.msra.mxu0 0.0
  %116 = vmatprep.subr.mxu0 0.0
  %117 = vmatpush1.msra.mxu0 0.0
  %118 = vmatprep.subr.mxu0 0.0
  %119 = vmatpush1.msra.mxu0 0.0
  %120 = vmatprep.subr.mxu0 0.0
  %121 = vmatpush1.msra.mxu0 0.0
  %122 = vmatprep.subr.mxu0 0.0
  %123 = vmatpush1.msra.mxu0 0.0
  %124 = vmatprep.subr.mxu0 0.0
  %125 = vmatpush1.msra.mxu0 0.0
  %126 = vmatprep.subr.mxu0 0.0
  %127 = vmatpush1.msra.mxu0 0.0
  %128 = vmatprep.subr.mxu0 0.0
  %129 = vmatpush1.msra.mxu0 0.0
  %130 = vmatprep.subr.mxu0 0.0
  %131 = vmatpush1.msra.mxu0 0.0
  %132 = vmatprep.subr.mxu0 0.0
  %133 = vmatpush1.msra.mxu0 0.0
  %134 = vmatprep.subr.mxu0 0.0
  %135 = vmatpush1.msra.mxu0 0.0
  %136 = vmatprep.subr.mxu0 0.0
  %137 = vmatpush1.msra.mxu0 0.0
  %138 = vmatprep.subr.mxu0 0.0
  %139 = vmatpush1.msra.mxu0 0.0
  %140 = vmatprep.subr.mxu0 0.0
  %141 = vmatpush1.msra.mxu0 0.0
  %142 = vmatprep.subr.mxu0 0.0
  %143 = vmatpush1.msra.mxu0 0.0
  %144 = vmatprep.subr.mxu0 0.0
  %145 = vmatpush1.msra.mxu0 0.0
  %146 = vmatprep.subr.mxu0 0.0
  %147 = vmatpush1.msra.mxu0 0.0
  %148 = vmatprep.subr.mxu0 0.0
  %149 = vmatpush1.msra.mxu0 0.0
  %150 = vmatprep.subr.mxu0 0.0
  %151 = vmatpush1.msra.mxu0 0.0
  %152 = vmatprep.subr.mxu0 0.0
  %153 = vmatpush1.msra.mxu0 0.0
  %154 = vmatprep.mubr.f32.mxu0 0.0
  %155 = vmatmul.mubr.f32.gmra.mrb[0].mxu0 %v88
  %v156 = vpop.f32.mrb[0].mxu0
  %v157 = vadd.f32 0.0, %v156
  %v158 = vpop.f32.mrb[0].mxu0
  %159 = vdwg.mxu0
  %v160 = vadd.f32 %v83, %v157
  %v161 = vld [vmem:[%s7] sm:$0xff]
  %v162 = vld [vmem:[%s7 + $0x8] sm:$0xff]
  %v164 = vsel %vm86, %v73, 0
  %166 = vmatprep.subr.mxu0 0.0
  %167 = vmatpush1.msra.mxu0 %v161
  %168 = vmatprep.subr.mxu0 0.0
  %169 = vmatpush1.msra.mxu0 %v162
  %170 = vmatprep.subr.mxu0 0.0
  %171 = vmatpush1.msra.mxu0 0.0
  %172 = vmatprep.subr.mxu0 0.0
  %173 = vmatpush1.msra.mxu0 0.0
  %174 = vmatprep.subr.mxu0 0.0
  %175 = vmatpush1.msra.mxu0 0.0
  %176 = vmatprep.subr.mxu0 0.0
  %177 = vmatpush1.msra.mxu0 0.0
  %178 = vmatprep.subr.mxu0 0.0
  %179 = vmatpush1.msra.mxu0 0.0
  %180 = vmatprep.subr.mxu0 0.0
  %181 = vmatpush1.msra.mxu0 0.0
  %182 = vmatprep.subr.mxu0 0.0
  %183 = vmatpush1.msra.mxu0 0.0
  %184 = vmatprep.subr.mxu0 0.0
  %185 = vmatpush1.msra.mxu0 0.0
  %186 = vmatprep.subr.mxu0 0.0
  %187 = vmatpush1.msra.mxu0 0.0
  %188 = vmatprep.subr.mxu0 0.0
  %189 = vmatpush1.msra.mxu0 0.0
  %190 = vmatprep.subr.mxu0 0.0
  %191 = vmatpush1.msra.mxu0 0.0
  %192 = vmatprep.subr.mxu0 0.0
  %193 = vmatpush1.msra.mxu0 0.0
  %194 = vmatprep.subr.mxu0 0.0
  %195 = vmatpush1.msra.mxu0 0.0
  %196 = vmatprep.subr.mxu0 0.0
  %197 = vmatpush1.msra.mxu0 0.0
  %198 = vmatprep.subr.mxu0 0.0
  %199 = vmatpush1.msra.mxu0 0.0
  %200 = vmatprep.subr.mxu0 0.0
  %201 = vmatpush1.msra.mxu0 0.0
  %202 = vmatprep.subr.mxu0 0.0
  %203 = vmatpush1.msra.mxu0 0.0
  %204 = vmatprep.subr.mxu0 0.0
  %205 = vmatpush1.msra.mxu0 0.0
  %206 = vmatprep.subr.mxu0 0.0
  %207 = vmatpush1.msra.mxu0 0.0
  %208 = vmatprep.subr.mxu0 0.0
  %209 = vmatpush1.msra.mxu0 0.0
  %210 = vmatprep.subr.mxu0 0.0
  %211 = vmatpush1.msra.mxu0 0.0
  %212 = vmatprep.subr.mxu0 0.0
  %213 = vmatpush1.msra.mxu0 0.0
  %214 = vmatprep.subr.mxu0 0.0
  %215 = vmatpush1.msra.mxu0 0.0
  %216 = vmatprep.subr.mxu0 0.0
  %217 = vmatpush1.msra.mxu0 0.0
  %218 = vmatprep.subr.mxu0 0.0
  %219 = vmatpush1.msra.mxu0 0.0
  %220 = vmatprep.subr.mxu0 0.0
  %221 = vmatpush1.msra.mxu0 0.0
  %222 = vmatprep.subr.mxu0 0.0
  %223 = vmatpush1.msra.mxu0 0.0
  %224 = vmatprep.subr.mxu0 0.0
  %225 = vmatpush1.msra.mxu0 0.0
  %226 = vmatprep.subr.mxu0 0.0
  %227 = vmatpush1.msra.mxu0 0.0
  %228 = vmatprep.subr.mxu0 0.0
  %229 = vmatpush1.msra.mxu0 0.0
  %230 = vmatprep.mubr.f32.mxu0 0.0
  %231 = vmatmul.mubr.f32.gmra.mrb[0].mxu0 %v164
  %v232 = vpop.f32.mrb[0].mxu0
  %v233 = vadd.f32 0.0, %v232
  %v234 = vpop.f32.mrb[0].mxu0
  %235 = vdwg.mxu0
  %v236 = vadd.f32 %v160, %v233
  %v237 = vld [vmem:[%s3] sm:$0x1]
  %v238 = vld [vmem:[%s8] sm:$0xff]
  %v239 = vld [vmem:[%s8 + $0x8] sm:$0xff]
  %v241 = vsel %vm86, %v237, 0
  %243 = vmatprep.subr.mxu0 0.0
  %244 = vmatpush1.msra.mxu0 %v238
  %245 = vmatprep.subr.mxu0 0.0
  %246 = vmatpush1.msra.mxu0 %v239
  %247 = vmatprep.subr.mxu0 0.0
  %248 = vmatpush1.msra.mxu0 0.0
  %249 = vmatprep.subr.mxu0 0.0
  %250 = vmatpush1.msra.mxu0 0.0
  %251 = vmatprep.subr.mxu0 0.0
  %252 = vmatpush1.msra.mxu0 0.0
  %253 = vmatprep.subr.mxu0 0.0
  %254 = vmatpush1.msra.mxu0 0.0
  %255 = vmatprep.subr.mxu0 0.0
  %256 = vmatpush1.msra.mxu0 0.0
  %257 = vmatprep.subr.mxu0 0.0
  %258 = vmatpush1.msra.mxu0 0.0
  %259 = vmatprep.subr.mxu0 0.0
  %260 = vmatpush1.msra.mxu0 0.0
  %261 = vmatprep.subr.mxu0 0.0
  %262 = vmatpush1.msra.mxu0 0.0
  %263 = vmatprep.subr.mxu0 0.0
  %264 = vmatpush1.msra.mxu0 0.0
  %265 = vmatprep.subr.mxu0 0.0
  %266 = vmatpush1.msra.mxu0 0.0
  %267 = vmatprep.subr.mxu0 0.0
  %268 = vmatpush1.msra.mxu0 0.0
  %269 = vmatprep.subr.mxu0 0.0
  %270 = vmatpush1.msra.mxu0 0.0
  %271 = vmatprep.subr.mxu0 0.0
  %272 = vmatpush1.msra.mxu0 0.0
  %273 = vmatprep.subr.mxu0 0.0
  %274 = vmatpush1.msra.mxu0 0.0
  %275 = vmatprep.subr.mxu0 0.0
  %276 = vmatpush1.msra.mxu0 0.0
  %277 = vmatprep.subr.mxu0 0.0
  %278 = vmatpush1.msra.mxu0 0.0
  %279 = vmatprep.subr.mxu0 0.0
  %280 = vmatpush1.msra.mxu0 0.0
  %281 = vmatprep.subr.mxu0 0.0
  %282 = vmatpush1.msra.mxu0 0.0
  %283 = vmatprep.subr.mxu0 0.0
  %284 = vmatpush1.msra.mxu0 0.0
  %285 = vmatprep.subr.mxu0 0.0
  %286 = vmatpush1.msra.mxu0 0.0
  %287 = vmatprep.subr.mxu0 0.0
  %288 = vmatpush1.msra.mxu0 0.0
  %289 = vmatprep.subr.mxu0 0.0
  %290 = vmatpush1.msra.mxu0 0.0
  %291 = vmatprep.subr.mxu0 0.0
  %292 = vmatpush1.msra.mxu0 0.0
  %293 = vmatprep.subr.mxu0 0.0
  %294 = vmatpush1.msra.mxu0 0.0
  %295 = vmatprep.subr.mxu0 0.0
  %296 = vmatpush1.msra.mxu0 0.0
  %297 = vmatprep.subr.mxu0 0.0
  %298 = vmatpush1.msra.mxu0 0.0
  %299 = vmatprep.subr.mxu0 0.0
  %300 = vmatpush1.msra.mxu0 0.0
  %301 = vmatprep.subr.mxu0 0.0
  %302 = vmatpush1.msra.mxu0 0.0
  %303 = vmatprep.subr.mxu0 0.0
  %304 = vmatpush1.msra.mxu0 0.0
  %305 = vmatprep.subr.mxu0 0.0
  %306 = vmatpush1.msra.mxu0 0.0
  %307 = vmatprep.mubr.f32.mxu0 0.0
  %308 = vmatmul.mubr.f32.gmra.mrb[0].mxu0 %v241
  %v309 = vpop.f32.mrb[0].mxu0
  %v310 = vadd.f32 0.0, %v309
  %v311 = vpop.f32.mrb[0].mxu0
  %312 = vdwg.mxu0
  %v313 = vadd.f32 %v236, %v310
  %v314 = vld [vmem:[%s4] sm:$0x3f]
  %v316 = vsel %vm86, %v314, 0
  %318 = vmatprep.subr.mxu0 0.0
  %319 = vmatpush1.msra.mxu0 %v238
  %320 = vmatprep.subr.mxu0 0.0
  %321 = vmatpush1.msra.mxu0 %v239
  %322 = vmatprep.subr.mxu0 0.0
  %323 = vmatpush1.msra.mxu0 0.0
  %324 = vmatprep.subr.mxu0 0.0
  %325 = vmatpush1.msra.mxu0 0.0
  %326 = vmatprep.subr.mxu0 0.0
  %327 = vmatpush1.msra.mxu0 0.0
  %328 = vmatprep.subr.mxu0 0.0
  %329 = vmatpush1.msra.mxu0 0.0
  %330 = vmatprep.subr.mxu0 0.0
  %331 = vmatpush1.msra.mxu0 0.0
  %332 = vmatprep.subr.mxu0 0.0
  %333 = vmatpush1.msra.mxu0 0.0
  %334 = vmatprep.subr.mxu0 0.0
  %335 = vmatpush1.msra.mxu0 0.0
  %336 = vmatprep.subr.mxu0 0.0
  %337 = vmatpush1.msra.mxu0 0.0
  %338 = vmatprep.subr.mxu0 0.0
  %339 = vmatpush1.msra.mxu0 0.0
  %340 = vmatprep.subr.mxu0 0.0
  %341 = vmatpush1.msra.mxu0 0.0
  %342 = vmatprep.subr.mxu0 0.0
  %343 = vmatpush1.msra.mxu0 0.0
  %344 = vmatprep.subr.mxu0 0.0
  %345 = vmatpush1.msra.mxu0 0.0
  %346 = vmatprep.subr.mxu0 0.0
  %347 = vmatpush1.msra.mxu0 0.0
  %348 = vmatprep.subr.mxu0 0.0
  %349 = vmatpush1.msra.mxu0 0.0
  %350 = vmatprep.subr.mxu0 0.0
  %351 = vmatpush1.msra.mxu0 0.0
  %352 = vmatprep.subr.mxu0 0.0
  %353 = vmatpush1.msra.mxu0 0.0
  %354 = vmatprep.subr.mxu0 0.0
  %355 = vmatpush1.msra.mxu0 0.0
  %356 = vmatprep.subr.mxu0 0.0
  %357 = vmatpush1.msra.mxu0 0.0
  %358 = vmatprep.subr.mxu0 0.0
  %359 = vmatpush1.msra.mxu0 0.0
  %360 = vmatprep.subr.mxu0 0.0
  %361 = vmatpush1.msra.mxu0 0.0
  %362 = vmatprep.subr.mxu0 0.0
  %363 = vmatpush1.msra.mxu0 0.0
  %364 = vmatprep.subr.mxu0 0.0
  %365 = vmatpush1.msra.mxu0 0.0
  %366 = vmatprep.subr.mxu0 0.0
  %367 = vmatpush1.msra.mxu0 0.0
  %368 = vmatprep.subr.mxu0 0.0
  %369 = vmatpush1.msra.mxu0 0.0
  %370 = vmatprep.subr.mxu0 0.0
  %371 = vmatpush1.msra.mxu0 0.0
  %372 = vmatprep.subr.mxu0 0.0
  %373 = vmatpush1.msra.mxu0 0.0
  %374 = vmatprep.subr.mxu0 0.0
  %375 = vmatpush1.msra.mxu0 0.0
  %376 = vmatprep.subr.mxu0 0.0
  %377 = vmatpush1.msra.mxu0 0.0
  %378 = vmatprep.subr.mxu0 0.0
  %379 = vmatpush1.msra.mxu0 0.0
  %380 = vmatprep.subr.mxu0 0.0
  %381 = vmatpush1.msra.mxu0 0.0
  %382 = vmatprep.mubr.f32.mxu0 0.0
  %383 = vmatmul.mubr.f32.gmra.mrb[0].mxu0 %v316
  %v384 = vpop.f32.mrb[0].mxu0
  %v385 = vadd.f32 0.0, %v384
  %v386 = vpop.f32.mrb[0].mxu0
  %387 = vdwg.mxu0
  %v389 = vlaneseq
  %v390 = vshrl.u32 %v389, 7
  %v391 = vsub.s32 0, %v390
  %v392 = vrot.slane %v313, %v391
  %v394 = vadd.f32 %v392, %v385
  %v395 = vld [vmem:[%s5] sm:$0x3f]
  %v396 = vld [vmem:[%s9] sm:$0xff]
  %v397 = vld [vmem:[%s9 + $0x8] sm:$0xff]
  %v399 = vsel %vm86, %v395, 0
  %401 = vmatprep.subr.mxu0 0.0
  %402 = vmatpush1.msra.mxu0 %v396
  %403 = vmatprep.subr.mxu0 0.0
  %404 = vmatpush1.msra.mxu0 %v397
  %405 = vmatprep.subr.mxu0 0.0
  %406 = vmatpush1.msra.mxu0 0.0
  %407 = vmatprep.subr.mxu0 0.0
  %408 = vmatpush1.msra.mxu0 0.0
  %409 = vmatprep.subr.mxu0 0.0
  %410 = vmatpush1.msra.mxu0 0.0
  %411 = vmatprep.subr.mxu0 0.0
  %412 = vmatpush1.msra.mxu0 0.0
  %413 = vmatprep.subr.mxu0 0.0
  %414 = vmatpush1.msra.mxu0 0.0
  %415 = vmatprep.subr.mxu0 0.0
  %416 = vmatpush1.msra.mxu0 0.0
  %417 = vmatprep.subr.mxu0 0.0
  %418 = vmatpush1.msra.mxu0 0.0
  %419 = vmatprep.subr.mxu0 0.0
  %420 = vmatpush1.msra.mxu0 0.0
  %421 = vmatprep.subr.mxu0 0.0
  %422 = vmatpush1.msra.mxu0 0.0
  %423 = vmatprep.subr.mxu0 0.0
  %424 = vmatpush1.msra.mxu0 0.0
  %425 = vmatprep.subr.mxu0 0.0
  %426 = vmatpush1.msra.mxu0 0.0
  %427 = vmatprep.subr.mxu0 0.0
  %428 = vmatpush1.msra.mxu0 0.0
  %429 = vmatprep.subr.mxu0 0.0
  %430 = vmatpush1.msra.mxu0 0.0
  %431 = vmatprep.subr.mxu0 0.0
  %432 = vmatpush1.msra.mxu0 0.0
  %433 = vmatprep.subr.mxu0 0.0
  %434 = vmatpush1.msra.mxu0 0.0
  %435 = vmatprep.subr.mxu0 0.0
  %436 = vmatpush1.msra.mxu0 0.0
  %437 = vmatprep.subr.mxu0 0.0
  %438 = vmatpush1.msra.mxu0 0.0
  %439 = vmatprep.subr.mxu0 0.0
  %440 = vmatpush1.msra.mxu0 0.0
  %441 = vmatprep.subr.mxu0 0.0
  %442 = vmatpush1.msra.mxu0 0.0
  %443 = vmatprep.subr.mxu0 0.0
  %444 = vmatpush1.msra.mxu0 0.0
  %445 = vmatprep.subr.mxu0 0.0
  %446 = vmatpush1.msra.mxu0 0.0
  %447 = vmatprep.subr.mxu0 0.0
  %448 = vmatpush1.msra.mxu0 0.0
  %449 = vmatprep.subr.mxu0 0.0
  %450 = vmatpush1.msra.mxu0 0.0
  %451 = vmatprep.subr.mxu0 0.0
  %452 = vmatpush1.msra.mxu0 0.0
  %453 = vmatprep.subr.mxu0 0.0
  %454 = vmatpush1.msra.mxu0 0.0
  %455 = vmatprep.subr.mxu0 0.0
  %456 = vmatpush1.msra.mxu0 0.0
  %457 = vmatprep.subr.mxu0 0.0
  %458 = vmatpush1.msra.mxu0 0.0
  %459 = vmatprep.subr.mxu0 0.0
  %460 = vmatpush1.msra.mxu0 0.0
  %461 = vmatprep.subr.mxu0 0.0
  %462 = vmatpush1.msra.mxu0 0.0
  %463 = vmatprep.subr.mxu0 0.0
  %464 = vmatpush1.msra.mxu0 0.0
  %465 = vmatprep.mubr.f32.mxu0 0.0
  %466 = vmatmul.mubr.f32.gmra.mrb[0].mxu0 %v399
  %v467 = vpop.f32.mrb[0].mxu0
  %v468 = vadd.f32 0.0, %v467
  %v469 = vpop.f32.mrb[0].mxu0
  %470 = vdwg.mxu0
  %v471 = vadd.f32 %v394, %v468
  %vm472 = vcmask 521216
  %473 = vst.msk [vmem:[%s11] sm:$0x3f] %vm472, %v471
  // Predicated region
  $region46: #{episode_forward.6} parent=0 // pred_check
    _
  $region47: #{episode_forward.6} parent=0 // pred_check_branch
    %475 = sbr.rel (0) target = $region49
  $region48: #{episode_forward.6} parent=0 // pred_region
    _
  $region49: #{episode_forward.6} parent=0 // pred_fallthru
    _
  // Predicated region
  $region50: #{episode_forward.6} parent=0 // pred_check
    _
  $region51: #{episode_forward.6} parent=0 // pred_check_branch
    %477 = sbr.rel (0) target = $region53
  $region52: #{episode_forward.6} parent=0 // pred_region
    _
  $region53: #{episode_forward.6} parent=0 // pred_fallthru
    _

// kernel: episode_forward.4
$region0: #{episode_forward.4}
  #allocation0 [shape = 'u32[]', space=smem, size = 0x4, offset = 0x4, fixed_abs, tag = 'smem constant byte address 0x4 - core index']
  #allocation1 [shape = 'u32[144,128]{1,0:T(1,128)}', space=vmem, size = 0x12000, scoped, tag = 'internal scratch']
  %s0 = inlined_call_operand.vmem [shape: f32[11,24], index: 0, kind: input, shape index: {}]
  %s1 = inlined_call_operand.vmem [shape: f32[24,24], index: 1, kind: input, shape index: {}]
  %s2 = inlined_call_operand.vmem [shape: f32[1,24], index: 2, kind: input, shape index: {}]
  %s3 = inlined_call_operand.vmem [shape: f32[24,16], index: 3, kind: input, shape index: {}]
  %s4 = inlined_call_operand.vmem [shape: f32[1,16], index: 4, kind: input, shape index: {}]
  %s5 = inlined_call_operand.vmem [shape: f32[11,16], index: 5, kind: output, shape index: {}]
  %s6 = sld [smem:[#allocation0]]
  $region30: #{episode_forward.4} parent=0
    _
  %s8 = ssub.s32 1, %s6
  %s9 = scalar_select 0, %s8, %s6
  // Predicated region
  $region2: #{episode_forward.4} parent=0 // pred_check
    _
  $region3: #{episode_forward.4} parent=0 // pred_check_branch
    %11 = sbr.rel (0) target = $region5
  $region4: #{episode_forward.4} parent=0 // pred_region
    _
  $region5: #{episode_forward.4} parent=0 // pred_fallthru
    _
  // Predicated region
  $region6: #{episode_forward.4} parent=0 // pred_check
    _
  $region7: #{episode_forward.4} parent=0 // pred_check_branch
    %13 = sbr.rel (0) target = $region9
  $region8: #{episode_forward.4} parent=0 // pred_region
    _
  $region9: #{episode_forward.4} parent=0 // pred_fallthru
    _
  // Predicated region
  $region10: #{episode_forward.4} parent=0 // pred_check
    _
  $region11: #{episode_forward.4} parent=0 // pred_check_branch
    %15 = sbr.rel (0) target = $region13
  $region12: #{episode_forward.4} parent=0 // pred_region
    _
  $region13: #{episode_forward.4} parent=0 // pred_fallthru
    _
  // Predicated region
  $region14: #{episode_forward.4} parent=0 // pred_check
    _
  $region15: #{episode_forward.4} parent=0 // pred_check_branch
    %17 = sbr.rel (0) target = $region17
  $region16: #{episode_forward.4} parent=0 // pred_region
    _
  $region17: #{episode_forward.4} parent=0 // pred_fallthru
    _
  // Predicated region
  $region18: #{episode_forward.4} parent=0 // pred_check
    _
  $region19: #{episode_forward.4} parent=0 // pred_check_branch
    %19 = sbr.rel (0) target = $region21
  $region20: #{episode_forward.4} parent=0 // pred_region
    _
  $region21: #{episode_forward.4} parent=0 // pred_fallthru
    _
  %v20 = vld [vmem:[%s0] sm:$0xff]
  %v21 = vld [vmem:[%s0 + $0x8] sm:$0x7]
  %v22 = vld [vmem:[%s1] sm:$0xff]
  %v23 = vld [vmem:[%s1 + $0x8] sm:$0xff]
  %v24 = vld [vmem:[%s1 + $0x10] sm:$0xff]
  %v25 = vld [vmem:[%s2] sm:$0x1]
  %v27 = vlaneseq
  %v28 = vshrl.u32 %v27, 7
  %v29 = vsub.s32 0, %v28
  %v30 = vrot.slane %v25, %v29
  %vm32 = vcmask 195584
  %v34 = vsel %vm32, %v20, 0
  %v37 = vsel %vm32, %v21, 0
  %39 = vmatprep.subr.mxu0 0.0
  %40 = vmatpush1.msra.mxu0 %v22
  %41 = vmatprep.subr.mxu0 0.0
  %42 = vmatpush1.msra.mxu0 %v23
  %43 = vmatprep.subr.mxu0 0.0
  %44 = vmatpush1.msra.mxu0 %v24
  %45 = vmatprep.subr.mxu0 0.0
  %46 = vmatpush1.msra.mxu0 0.0
  %47 = vmatprep.subr.mxu0 0.0
  %48 = vmatpush1.msra.mxu0 0.0
  %49 = vmatprep.subr.mxu0 0.0
  %50 = vmatpush1.msra.mxu0 0.0
  %51 = vmatprep.subr.mxu0 0.0
  %52 = vmatpush1.msra.mxu0 0.0
  %53 = vmatprep.subr.mxu0 0.0
  %54 = vmatpush1.msra.mxu0 0.0
  %55 = vmatprep.subr.mxu0 0.0
  %56 = vmatpush1.msra.mxu0 0.0
  %57 = vmatprep.subr.mxu0 0.0
  %58 = vmatpush1.msra.mxu0 0.0
  %59 = vmatprep.subr.mxu0 0.0
  %60 = vmatpush1.msra.mxu0 0.0
  %61 = vmatprep.subr.mxu0 0.0
  %62 = vmatpush1.msra.mxu0 0.0
  %63 = vmatprep.subr.mxu0 0.0
  %64 = vmatpush1.msra.mxu0 0.0
  %65 = vmatprep.subr.mxu0 0.0
  %66 = vmatpush1.msra.mxu0 0.0
  %67 = vmatprep.subr.mxu0 0.0
  %68 = vmatpush1.msra.mxu0 0.0
  %69 = vmatprep.subr.mxu0 0.0
  %70 = vmatpush1.msra.mxu0 0.0
  %71 = vmatprep.subr.mxu0 0.0
  %72 = vmatpush1.msra.mxu0 0.0
  %73 = vmatprep.subr.mxu0 0.0
  %74 = vmatpush1.msra.mxu0 0.0
  %75 = vmatprep.subr.mxu0 0.0
  %76 = vmatpush1.msra.mxu0 0.0
  %77 = vmatprep.subr.mxu0 0.0
  %78 = vmatpush1.msra.mxu0 0.0
  %79 = vmatprep.subr.mxu0 0.0
  %80 = vmatpush1.msra.mxu0 0.0
  %81 = vmatprep.subr.mxu0 0.0
  %82 = vmatpush1.msra.mxu0 0.0
  %83 = vmatprep.subr.mxu0 0.0
  %84 = vmatpush1.msra.mxu0 0.0
  %85 = vmatprep.subr.mxu0 0.0
  %86 = vmatpush1.msra.mxu0 0.0
  %87 = vmatprep.subr.mxu0 0.0
  %88 = vmatpush1.msra.mxu0 0.0
  %89 = vmatprep.subr.mxu0 0.0
  %90 = vmatpush1.msra.mxu0 0.0
  %91 = vmatprep.subr.mxu0 0.0
  %92 = vmatpush1.msra.mxu0 0.0
  %93 = vmatprep.subr.mxu0 0.0
  %94 = vmatpush1.msra.mxu0 0.0
  %95 = vmatprep.subr.mxu0 0.0
  %96 = vmatpush1.msra.mxu0 0.0
  %97 = vmatprep.subr.mxu0 0.0
  %98 = vmatpush1.msra.mxu0 0.0
  %99 = vmatprep.subr.mxu0 0.0
  %100 = vmatpush1.msra.mxu0 0.0
  %101 = vmatprep.subr.mxu0 0.0
  %102 = vmatpush1.msra.mxu0 0.0
  %103 = vmatprep.mubr.f32.mxu0 0.0
  %104 = vmatmul.mubr.f32.gmra.mrb[0].mxu0 %v34
  %v105 = vpop.f32.mrb[0].mxu0
  %v106 = vadd.f32 %v30, %v105
  %v107 = vpop.f32.mrb[0].mxu0
  %108 = vmatprep.mubr.f32.mxu0 0.0
  %109 = vmatmul.mubr.f32.gmra.mrb[0].mxu0 %v37
  %v110 = vpop.f32.mrb[0].mxu0
  %v111 = vadd.f32 %v30, %v110
  %v112 = vpop.f32.mrb[0].mxu0
  %113 = vdwg.mxu0
  %v114 = vmax.f32 %v106, 0.0
  %v115 = vmax.f32 %v111, 0.0
  %v116 = vld [vmem:[%s3] sm:$0xff]
  %v117 = vld [vmem:[%s3 + $0x8] sm:$0xff]
  %v118 = vld [vmem:[%s3 + $0x10] sm:$0xff]
  %v119 = vld [vmem:[%s4] sm:$0x1]
  %v121 = vlaneseq
  %v122 = vshrl.u32 %v121, 7
  %v123 = vsub.s32 0, %v122
  %v124 = vrot.slane %v119, %v123
  %v127 = vsel %vm32, %v114, 0
  %v130 = vsel %vm32, %v115, 0
  %132 = vmatprep.subr.mxu0 0.0
  %133 = vmatpush1.msra.mxu0 %v116
  %134 = vmatprep.subr.mxu0 0.0
  %135 = vmatpush1.msra.mxu0 %v117
  %136 = vmatprep.subr.mxu0 0.0
  %137 = vmatpush1.msra.mxu0 %v118
  %138 = vmatprep.subr.mxu0 0.0
  %139 = vmatpush1.msra.mxu0 0.0
  %140 = vmatprep.subr.mxu0 0.0
  %141 = vmatpush1.msra.mxu0 0.0
  %142 = vmatprep.subr.mxu0 0.0
  %143 = vmatpush1.msra.mxu0 0.0
  %144 = vmatprep.subr.mxu0 0.0
  %145 = vmatpush1.msra.mxu0 0.0
  %146 = vmatprep.subr.mxu0 0.0
  %147 = vmatpush1.msra.mxu0 0.0
  %148 = vmatprep.subr.mxu0 0.0
  %149 = vmatpush1.msra.mxu0 0.0
  %150 = vmatprep.subr.mxu0 0.0
  %151 = vmatpush1.msra.mxu0 0.0
  %152 = vmatprep.subr.mxu0 0.0
  %153 = vmatpush1.msra.mxu0 0.0
  %154 = vmatprep.subr.mxu0 0.0
  %155 = vmatpush1.msra.mxu0 0.0
  %156 = vmatprep.subr.mxu0 0.0
  %157 = vmatpush1.msra.mxu0 0.0
  %158 = vmatprep.subr.mxu0 0.0
  %159 = vmatpush1.msra.mxu0 0.0
  %160 = vmatprep.subr.mxu0 0.0
  %161 = vmatpush1.msra.mxu0 0.0
  %162 = vmatprep.subr.mxu0 0.0
  %163 = vmatpush1.msra.mxu0 0.0
  %164 = vmatprep.subr.mxu0 0.0
  %165 = vmatpush1.msra.mxu0 0.0
  %166 = vmatprep.subr.mxu0 0.0
  %167 = vmatpush1.msra.mxu0 0.0
  %168 = vmatprep.subr.mxu0 0.0
  %169 = vmatpush1.msra.mxu0 0.0
  %170 = vmatprep.subr.mxu0 0.0
  %171 = vmatpush1.msra.mxu0 0.0
  %172 = vmatprep.subr.mxu0 0.0
  %173 = vmatpush1.msra.mxu0 0.0
  %174 = vmatprep.subr.mxu0 0.0
  %175 = vmatpush1.msra.mxu0 0.0
  %176 = vmatprep.subr.mxu0 0.0
  %177 = vmatpush1.msra.mxu0 0.0
  %178 = vmatprep.subr.mxu0 0.0
  %179 = vmatpush1.msra.mxu0 0.0
  %180 = vmatprep.subr.mxu0 0.0
  %181 = vmatpush1.msra.mxu0 0.0
  %182 = vmatprep.subr.mxu0 0.0
  %183 = vmatpush1.msra.mxu0 0.0
  %184 = vmatprep.subr.mxu0 0.0
  %185 = vmatpush1.msra.mxu0 0.0
  %186 = vmatprep.subr.mxu0 0.0
  %187 = vmatpush1.msra.mxu0 0.0
  %188 = vmatprep.subr.mxu0 0.0
  %189 = vmatpush1.msra.mxu0 0.0
  %190 = vmatprep.subr.mxu0 0.0
  %191 = vmatpush1.msra.mxu0 0.0
  %192 = vmatprep.subr.mxu0 0.0
  %193 = vmatpush1.msra.mxu0 0.0
  %194 = vmatprep.subr.mxu0 0.0
  %195 = vmatpush1.msra.mxu0 0.0
  %196 = vmatprep.mubr.f32.mxu0 0.0
  %197 = vmatmul.mubr.f32.gmra.mrb[0].mxu0 %v127
  %v198 = vpop.f32.mrb[0].mxu0
  %v199 = vadd.f32 %v124, %v198
  %v200 = vpop.f32.mrb[0].mxu0
  %201 = vmatprep.mubr.f32.mxu0 0.0
  %202 = vmatmul.mubr.f32.gmra.mrb[0].mxu0 %v130
  %v203 = vpop.f32.mrb[0].mxu0
  %v204 = vadd.f32 %v124, %v203
  %v205 = vpop.f32.mrb[0].mxu0
  %206 = vdwg.mxu0
  %vm207 = vcmask 130048
  %208 = vst.msk [vmem:[%s5] sm:$0xff] %vm207, %v199
  %vm209 = vcmask 124928
  %210 = vst.msk [vmem:[%s5 + $0x8] sm:$0x7] %vm209, %v204
  // Predicated region
  $region22: #{episode_forward.4} parent=0 // pred_check
    _
  $region23: #{episode_forward.4} parent=0 // pred_check_branch
    %212 = sbr.rel (0) target = $region25
  $region24: #{episode_forward.4} parent=0 // pred_region
    _
  $region25: #{episode_forward.4} parent=0 // pred_fallthru
    _
  // Predicated region
  $region26: #{episode_forward.4} parent=0 // pred_check
    _
  $region27: #{episode_forward.4} parent=0 // pred_check_branch
    %214 = sbr.rel (0) target = $region29
  $region28: #{episode_forward.4} parent=0 // pred_region
    _
  $region29: #{episode_forward.4} parent=0 // pred_fallthru
    _

// kernel: episode_forward.5
$region0: #{episode_forward.5}
  #allocation0 [shape = 'u32[]', space=smem, size = 0x4, offset = 0x4, fixed_abs, tag = 'smem constant byte address 0x4 - core index']
  #allocation1 [shape = 'u32[144,128]{1,0:T(1,128)}', space=vmem, size = 0x12000, scoped, tag = 'internal scratch']
  %s0 = inlined_call_operand.vmem [shape: f32[10,32], index: 0, kind: input, shape index: {}]
  %s1 = inlined_call_operand.vmem [shape: f32[32,32], index: 1, kind: input, shape index: {}]
  %s2 = inlined_call_operand.vmem [shape: f32[1,32], index: 2, kind: input, shape index: {}]
  %s3 = inlined_call_operand.vmem [shape: f32[32,16], index: 3, kind: input, shape index: {}]
  %s4 = inlined_call_operand.vmem [shape: f32[1,16], index: 4, kind: input, shape index: {}]
  %s5 = inlined_call_operand.vmem [shape: f32[10,16], index: 5, kind: output, shape index: {}]
  %s6 = sld [smem:[#allocation0]]
  $region30: #{episode_forward.5} parent=0
    _
  %s8 = ssub.s32 1, %s6
  %s9 = scalar_select 0, %s8, %s6
  // Predicated region
  $region2: #{episode_forward.5} parent=0 // pred_check
    _
  $region3: #{episode_forward.5} parent=0 // pred_check_branch
    %11 = sbr.rel (0) target = $region5
  $region4: #{episode_forward.5} parent=0 // pred_region
    _
  $region5: #{episode_forward.5} parent=0 // pred_fallthru
    _
  // Predicated region
  $region6: #{episode_forward.5} parent=0 // pred_check
    _
  $region7: #{episode_forward.5} parent=0 // pred_check_branch
    %13 = sbr.rel (0) target = $region9
  $region8: #{episode_forward.5} parent=0 // pred_region
    _
  $region9: #{episode_forward.5} parent=0 // pred_fallthru
    _
  // Predicated region
  $region10: #{episode_forward.5} parent=0 // pred_check
    _
  $region11: #{episode_forward.5} parent=0 // pred_check_branch
    %15 = sbr.rel (0) target = $region13
  $region12: #{episode_forward.5} parent=0 // pred_region
    _
  $region13: #{episode_forward.5} parent=0 // pred_fallthru
    _
  // Predicated region
  $region14: #{episode_forward.5} parent=0 // pred_check
    _
  $region15: #{episode_forward.5} parent=0 // pred_check_branch
    %17 = sbr.rel (0) target = $region17
  $region16: #{episode_forward.5} parent=0 // pred_region
    _
  $region17: #{episode_forward.5} parent=0 // pred_fallthru
    _
  // Predicated region
  $region18: #{episode_forward.5} parent=0 // pred_check
    _
  $region19: #{episode_forward.5} parent=0 // pred_check_branch
    %19 = sbr.rel (0) target = $region21
  $region20: #{episode_forward.5} parent=0 // pred_region
    _
  $region21: #{episode_forward.5} parent=0 // pred_fallthru
    _
  %v20 = vld [vmem:[%s0] sm:$0xff]
  %v21 = vld [vmem:[%s0 + $0x8] sm:$0x3]
  %v22 = vld [vmem:[%s1] sm:$0xff]
  %v23 = vld [vmem:[%s1 + $0x8] sm:$0xff]
  %v24 = vld [vmem:[%s1 + $0x10] sm:$0xff]
  %v25 = vld [vmem:[%s1 + $0x18] sm:$0xff]
  %v26 = vld [vmem:[%s2] sm:$0x1]
  %v28 = vlaneseq
  %v29 = vshrl.u32 %v28, 7
  %v30 = vsub.s32 0, %v29
  %v31 = vrot.slane %v26, %v30
  %vm33 = vcmask 261120
  %v35 = vsel %vm33, %v20, 0
  %v38 = vsel %vm33, %v21, 0
  %40 = vmatprep.subr.mxu0 0.0
  %41 = vmatpush1.msra.mxu0 %v22
  %42 = vmatprep.subr.mxu0 0.0
  %43 = vmatpush1.msra.mxu0 %v23
  %44 = vmatprep.subr.mxu0 0.0
  %45 = vmatpush1.msra.mxu0 %v24
  %46 = vmatprep.subr.mxu0 0.0
  %47 = vmatpush1.msra.mxu0 %v25
  %48 = vmatprep.subr.mxu0 0.0
  %49 = vmatpush1.msra.mxu0 0.0
  %50 = vmatprep.subr.mxu0 0.0
  %51 = vmatpush1.msra.mxu0 0.0
  %52 = vmatprep.subr.mxu0 0.0
  %53 = vmatpush1.msra.mxu0 0.0
  %54 = vmatprep.subr.mxu0 0.0
  %55 = vmatpush1.msra.mxu0 0.0
  %56 = vmatprep.subr.mxu0 0.0
  %57 = vmatpush1.msra.mxu0 0.0
  %58 = vmatprep.subr.mxu0 0.0
  %59 = vmatpush1.msra.mxu0 0.0
  %60 = vmatprep.subr.mxu0 0.0
  %61 = vmatpush1.msra.mxu0 0.0
  %62 = vmatprep.subr.mxu0 0.0
  %63 = vmatpush1.msra.mxu0 0.0
  %64 = vmatprep.subr.mxu0 0.0
  %65 = vmatpush1.msra.mxu0 0.0
  %66 = vmatprep.subr.mxu0 0.0
  %67 = vmatpush1.msra.mxu0 0.0
  %68 = vmatprep.subr.mxu0 0.0
  %69 = vmatpush1.msra.mxu0 0.0
  %70 = vmatprep.subr.mxu0 0.0
  %71 = vmatpush1.msra.mxu0 0.0
  %72 = vmatprep.subr.mxu0 0.0
  %73 = vmatpush1.msra.mxu0 0.0
  %74 = vmatprep.subr.mxu0 0.0
  %75 = vmatpush1.msra.mxu0 0.0
  %76 = vmatprep.subr.mxu0 0.0
  %77 = vmatpush1.msra.mxu0 0.0
  %78 = vmatprep.subr.mxu0 0.0
  %79 = vmatpush1.msra.mxu0 0.0
  %80 = vmatprep.subr.mxu0 0.0
  %81 = vmatpush1.msra.mxu0 0.0
  %82 = vmatprep.subr.mxu0 0.0
  %83 = vmatpush1.msra.mxu0 0.0
  %84 = vmatprep.subr.mxu0 0.0
  %85 = vmatpush1.msra.mxu0 0.0
  %86 = vmatprep.subr.mxu0 0.0
  %87 = vmatpush1.msra.mxu0 0.0
  %88 = vmatprep.subr.mxu0 0.0
  %89 = vmatpush1.msra.mxu0 0.0
  %90 = vmatprep.subr.mxu0 0.0
  %91 = vmatpush1.msra.mxu0 0.0
  %92 = vmatprep.subr.mxu0 0.0
  %93 = vmatpush1.msra.mxu0 0.0
  %94 = vmatprep.subr.mxu0 0.0
  %95 = vmatpush1.msra.mxu0 0.0
  %96 = vmatprep.subr.mxu0 0.0
  %97 = vmatpush1.msra.mxu0 0.0
  %98 = vmatprep.subr.mxu0 0.0
  %99 = vmatpush1.msra.mxu0 0.0
  %100 = vmatprep.subr.mxu0 0.0
  %101 = vmatpush1.msra.mxu0 0.0
  %102 = vmatprep.subr.mxu0 0.0
  %103 = vmatpush1.msra.mxu0 0.0
  %104 = vmatprep.mubr.f32.mxu0 0.0
  %105 = vmatmul.mubr.f32.gmra.mrb[0].mxu0 %v35
  %v106 = vpop.f32.mrb[0].mxu0
  %v107 = vadd.f32 %v31, %v106
  %v108 = vpop.f32.mrb[0].mxu0
  %109 = vmatprep.mubr.f32.mxu0 0.0
  %110 = vmatmul.mubr.f32.gmra.mrb[0].mxu0 %v38
  %v111 = vpop.f32.mrb[0].mxu0
  %v112 = vadd.f32 %v31, %v111
  %v113 = vpop.f32.mrb[0].mxu0
  %114 = vdwg.mxu0
  %v115 = vmax.f32 %v107, 0.0
  %v116 = vmax.f32 %v112, 0.0
  %v117 = vld [vmem:[%s3] sm:$0xff]
  %v118 = vld [vmem:[%s3 + $0x8] sm:$0xff]
  %v119 = vld [vmem:[%s3 + $0x10] sm:$0xff]
  %v120 = vld [vmem:[%s3 + $0x18] sm:$0xff]
  %v121 = vld [vmem:[%s4] sm:$0x1]
  %v123 = vlaneseq
  %v124 = vshrl.u32 %v123, 7
  %v125 = vsub.s32 0, %v124
  %v126 = vrot.slane %v121, %v125
  %v129 = vsel %vm33, %v115, 0
  %v132 = vsel %vm33, %v116, 0
  %134 = vmatprep.subr.mxu0 0.0
  %135 = vmatpush1.msra.mxu0 %v117
  %136 = vmatprep.subr.mxu0 0.0
  %137 = vmatpush1.msra.mxu0 %v118
  %138 = vmatprep.subr.mxu0 0.0
  %139 = vmatpush1.msra.mxu0 %v119
  %140 = vmatprep.subr.mxu0 0.0
  %141 = vmatpush1.msra.mxu0 %v120
  %142 = vmatprep.subr.mxu0 0.0
  %143 = vmatpush1.msra.mxu0 0.0
  %144 = vmatprep.subr.mxu0 0.0
  %145 = vmatpush1.msra.mxu0 0.0
  %146 = vmatprep.subr.mxu0 0.0
  %147 = vmatpush1.msra.mxu0 0.0
  %148 = vmatprep.subr.mxu0 0.0
  %149 = vmatpush1.msra.mxu0 0.0
  %150 = vmatprep.subr.mxu0 0.0
  %151 = vmatpush1.msra.mxu0 0.0
  %152 = vmatprep.subr.mxu0 0.0
  %153 = vmatpush1.msra.mxu0 0.0
  %154 = vmatprep.subr.mxu0 0.0
  %155 = vmatpush1.msra.mxu0 0.0
  %156 = vmatprep.subr.mxu0 0.0
  %157 = vmatpush1.msra.mxu0 0.0
  %158 = vmatprep.subr.mxu0 0.0
  %159 = vmatpush1.msra.mxu0 0.0
  %160 = vmatprep.subr.mxu0 0.0
  %161 = vmatpush1.msra.mxu0 0.0
  %162 = vmatprep.subr.mxu0 0.0
  %163 = vmatpush1.msra.mxu0 0.0
  %164 = vmatprep.subr.mxu0 0.0
  %165 = vmatpush1.msra.mxu0 0.0
  %166 = vmatprep.subr.mxu0 0.0
  %167 = vmatpush1.msra.mxu0 0.0
  %168 = vmatprep.subr.mxu0 0.0
  %169 = vmatpush1.msra.mxu0 0.0
  %170 = vmatprep.subr.mxu0 0.0
  %171 = vmatpush1.msra.mxu0 0.0
  %172 = vmatprep.subr.mxu0 0.0
  %173 = vmatpush1.msra.mxu0 0.0
  %174 = vmatprep.subr.mxu0 0.0
  %175 = vmatpush1.msra.mxu0 0.0
  %176 = vmatprep.subr.mxu0 0.0
  %177 = vmatpush1.msra.mxu0 0.0
  %178 = vmatprep.subr.mxu0 0.0
  %179 = vmatpush1.msra.mxu0 0.0
  %180 = vmatprep.subr.mxu0 0.0
  %181 = vmatpush1.msra.mxu0 0.0
  %182 = vmatprep.subr.mxu0 0.0
  %183 = vmatpush1.msra.mxu0 0.0
  %184 = vmatprep.subr.mxu0 0.0
  %185 = vmatpush1.msra.mxu0 0.0
  %186 = vmatprep.subr.mxu0 0.0
  %187 = vmatpush1.msra.mxu0 0.0
  %188 = vmatprep.subr.mxu0 0.0
  %189 = vmatpush1.msra.mxu0 0.0
  %190 = vmatprep.subr.mxu0 0.0
  %191 = vmatpush1.msra.mxu0 0.0
  %192 = vmatprep.subr.mxu0 0.0
  %193 = vmatpush1.msra.mxu0 0.0
  %194 = vmatprep.subr.mxu0 0.0
  %195 = vmatpush1.msra.mxu0 0.0
  %196 = vmatprep.subr.mxu0 0.0
  %197 = vmatpush1.msra.mxu0 0.0
  %198 = vmatprep.mubr.f32.mxu0 0.0
  %199 = vmatmul.mubr.f32.gmra.mrb[0].mxu0 %v129
  %v200 = vpop.f32.mrb[0].mxu0
  %v201 = vadd.f32 %v126, %v200
  %v202 = vpop.f32.mrb[0].mxu0
  %203 = vmatprep.mubr.f32.mxu0 0.0
  %204 = vmatmul.mubr.f32.gmra.mrb[0].mxu0 %v132
  %v205 = vpop.f32.mrb[0].mxu0
  %v206 = vadd.f32 %v126, %v205
  %v207 = vpop.f32.mrb[0].mxu0
  %208 = vdwg.mxu0
  %vm209 = vcmask 130048
  %210 = vst.msk [vmem:[%s5] sm:$0xff] %vm209, %v201
  %vm211 = vcmask 123904
  %212 = vst.msk [vmem:[%s5 + $0x8] sm:$0x3] %vm211, %v206
  // Predicated region
  $region22: #{episode_forward.5} parent=0 // pred_check
    _
  $region23: #{episode_forward.5} parent=0 // pred_check_branch
    %214 = sbr.rel (0) target = $region25
  $region24: #{episode_forward.5} parent=0 // pred_region
    _
  $region25: #{episode_forward.5} parent=0 // pred_fallthru
    _
  // Predicated region
  $region26: #{episode_forward.5} parent=0 // pred_check
    _
  $region27: #{episode_forward.5} parent=0 // pred_check_branch
    %216 = sbr.rel (0) target = $region29
  $region28: #{episode_forward.5} parent=0 // pred_region
    _
  $region29: #{episode_forward.5} parent=0 // pred_fallthru
    _

// kernel: episode_forward.7
$region0: #{episode_forward.7}
  #allocation0 [shape = 'u32[]', space=smem, size = 0x4, offset = 0x4, fixed_abs, tag = 'smem constant byte address 0x4 - core index']
  #allocation1 [shape = 'u32[144,128]{1,0:T(1,128)}', space=vmem, size = 0x12000, scoped, tag = 'internal scratch']
  #allocation2 [shape = 'f32[32,1]{1,0:T(8,128)}', space=vmem, size = 0x4000, scoped, tag = 'scratch operand']
  #allocation3 [shape = 'f32[1,1]{1,0:T(1,128)S(1)}', space=vmem, size = 0x200, scoped, tag = 'scoped memory for episode_forward.7']
  %s0 = inlined_call_operand.vmem [shape: f32[2,64,3], index: 0, kind: input, shape index: {}]
  %s1 = inlined_call_operand.vmem [shape: f32[32,1], index: 1, kind: input, shape index: {}]
  %s2 = inlined_call_operand.vmem [shape: f32[32,64], index: 2, kind: input, shape index: {}]
  %s3 = inlined_call_operand.vmem [shape: f32[32,1], index: 3, kind: input, shape index: {}]
  %s4 = inlined_call_operand.vmem [shape: f32[256,32], index: 4, kind: input, shape index: {}]
  %s5 = inlined_call_operand.vmem [shape: f32[256,32], index: 5, kind: input, shape index: {}]
  %s6 = inlined_call_operand.vmem [shape: f32[256,1], index: 6, kind: input, shape index: {}]
  %s7 = inlined_call_operand.vmem [shape: f32[1,256], index: 7, kind: input, shape index: {}]
  %s8 = inlined_call_operand.<no memory space> [shape: f32[1,1], index: 8, kind: input, shape index: {}]
  %s9 = inlined_call_operand.hbm [shape: f32[2,1,3], index: 9, kind: output, shape index: {}]
  %s10 = sld [smem:[#allocation0]]
  $region73: #{episode_forward.7} parent=0
    _
  %s12 = ssub.s32 1, %s10
  %s13 = scalar_select 0, %s12, %s10
  %v14 = vstv %s8
  %15 = vst [vmem:[#allocation3] sm:$0x1] %v14
  $region1: #{episode_forward.7} parent=0
    #allocation4 [shape = 'u8[1024]{0}', space=vmem, size = 0x400, scoped, tag = 'output window, operand 0']
    #allocation5 [shape = 's32[2]{0}', space=sflag, size = 0x8, scoped, tag = 'scoped memory for episode_forward.7']
    %16 = vsyncpa [#allocation5], 0
    %s17 = scalar_lea.sflag [#allocation5], 1
    %18 = vsyncpa %s17, 0
    loop: start=0, step=1, limit=4
    $region2: #{episode_forward.7} parent=1 // loop_pre_header
      _
    $region3: #{episode_forward.7} parent=1 // loop_header
      %s20 = sphi 0, %s24
      %p21 = scmp.ge.s32.totalorder %s20, 4
      %s30 = sphi 0, %s32
      %s33 = sphi 0, %s30
      %s34 = sphi 0, %s33
      %s50 = sphi 0, %s34
      %s54 = sphi 0, %s54
      %s56 = sphi 0, %s54
      %s57 = sphi 0, %s56
      %s71 = sphi 0, %s57
      %s75 = sphi 0, %s75
      %s77 = sphi 0, %s75
      %s78 = sphi 0, %s77
      %s92 = sphi 0, %s78
      %s96 = sphi 0, %s96
      %s98 = sphi 0, %s96
      %s99 = sphi 0, %s98
      %s113 = sphi 0, %s99
      %s117 = sphi 0, %s117
      %s119 = sphi 0, %s117
      %s120 = sphi 0, %s119
      %s134 = sphi 0, %s120
      %s138 = sphi 0, %s138
      %s140 = sphi 0, %s138
      %s141 = sphi 0, %s140
      %s155 = sphi 0, %s141
      %s159 = sphi 0, %s159
      %s161 = sphi 0, %s159
      %s162 = sphi 0, %s161
      %s176 = sphi 0, %s162
      %s180 = sphi 0, %s180
      %s182 = sphi 0, %s180
      %s183 = sphi 0, %s182
      %s197 = sphi 0, %s183
      %s201 = sphi 0, %s201
      %s203 = sphi 0, %s201
      %s204 = sphi 0, %s203
      %s218 = sphi 0, %s204
      %s224 = sphi 0, %s226
      %s227 = sphi 0, %s224
      %s228 = sphi 0, %s227
      %s244 = sphi 0, %s228
    $region4: #{episode_forward.7} parent=1 // loop_header_branch
      %23 = sbr.rel (%p21) target = $region8
    $region5: #{episode_forward.7} parent=1 // loop_body
      %s25 = ssub.s32 %s20, 1
      %s26 = ssub.s32 %s20, 2
      %s27 = sadd.s32 %s20, 1
      %s28 = ssub.s32 %s20, %s27
      %p29 = scmp.eq.s32.totalorder %s28, 0
      %s31 = sadd.s32 %s30, 1
      %s32 = scalar_select %p29, %s30, %s31
      %p35 = pneg %p29
      %p36 = scmp.eq.s32.totalorder %s20, 1
      %p37 = por %p35, %p36
      %p38 = scmp.ne.s32.totalorder %s30, %s33
      %p39 = scmp.eq.s32.totalorder %s20, 0
      %p40 = por %p38, %p39
      %p41 = scmp.ne.s32.totalorder %s30, %s33
      %p42 = scmp.eq.s32.totalorder %s25, 1
      %p43 = por %p41, %p42
      %p44 = scmp.ne.s32.totalorder %s33, %s34
      %p45 = scmp.eq.s32.totalorder %s25, 0
      %p46 = por %p44, %p45
      %p47 = scmp.ne.s32.totalorder %s33, %s34
      %p48 = scmp.eq.s32.totalorder %s26, 1
      %p49 = por %p47, %p48
      %p51 = scmp.ne.s32.totalorder %s34, %s50
      %p52 = scmp.eq.s32.totalorder %s26, 0
      %p53 = por %p51, %p52
      %s55 = sadd.s32 %s54, 1
      %p58 = scmp.eq.s32.totalorder %s20, 1
      %p59 = scmp.ne.s32.totalorder %s54, %s56
      %p60 = scmp.eq.s32.totalorder %s20, 0
      %p61 = por %p59, %p60
      %p62 = scmp.ne.s32.totalorder %s54, %s56
      %p63 = scmp.eq.s32.totalorder %s25, 1
      %p64 = por %p62, %p63
      %p65 = scmp.ne.s32.totalorder %s56, %s57
      %p66 = scmp.eq.s32.totalorder %s25, 0
      %p67 = por %p65, %p66
      %p68 = scmp.ne.s32.totalorder %s56, %s57
      %p69 = scmp.eq.s32.totalorder %s26, 1
      %p70 = por %p68, %p69
      %p72 = scmp.ne.s32.totalorder %s57, %s71
      %p73 = scmp.eq.s32.totalorder %s26, 0
      %p74 = por %p72, %p73
      %s76 = sadd.s32 %s75, 1
      %p79 = scmp.eq.s32.totalorder %s20, 1
      %p80 = scmp.ne.s32.totalorder %s75, %s77
      %p81 = scmp.eq.s32.totalorder %s20, 0
      %p82 = por %p80, %p81
      %p83 = scmp.ne.s32.totalorder %s75, %s77
      %p84 = scmp.eq.s32.totalorder %s25, 1
      %p85 = por %p83, %p84
      %p86 = scmp.ne.s32.totalorder %s77, %s78
      %p87 = scmp.eq.s32.totalorder %s25, 0
      %p88 = por %p86, %p87
      %p89 = scmp.ne.s32.totalorder %s77, %s78
      %p90 = scmp.eq.s32.totalorder %s26, 1
      %p91 = por %p89, %p90
      %p93 = scmp.ne.s32.totalorder %s78, %s92
      %p94 = scmp.eq.s32.totalorder %s26, 0
      %p95 = por %p93, %p94
      %s97 = sadd.s32 %s96, 1
      %p100 = scmp.eq.s32.totalorder %s20, 1
      %p101 = scmp.ne.s32.totalorder %s96, %s98
      %p102 = scmp.eq.s32.totalorder %s20, 0
      %p103 = por %p101, %p102
      %p104 = scmp.ne.s32.totalorder %s96, %s98
      %p105 = scmp.eq.s32.totalorder %s25, 1
      %p106 = por %p104, %p105
      %p107 = scmp.ne.s32.totalorder %s98, %s99
      %p108 = scmp.eq.s32.totalorder %s25, 0
      %p109 = por %p107, %p108
      %p110 = scmp.ne.s32.totalorder %s98, %s99
      %p111 = scmp.eq.s32.totalorder %s26, 1
      %p112 = por %p110, %p111
      %p114 = scmp.ne.s32.totalorder %s99, %s113
      %p115 = scmp.eq.s32.totalorder %s26, 0
      %p116 = por %p114, %p115
      %s118 = sadd.s32 %s117, 1
      %p121 = scmp.eq.s32.totalorder %s20, 1
      %p122 = scmp.ne.s32.totalorder %s117, %s119
      %p123 = scmp.eq.s32.totalorder %s20, 0
      %p124 = por %p122, %p123
      %p125 = scmp.ne.s32.totalorder %s117, %s119
      %p126 = scmp.eq.s32.totalorder %s25, 1
      %p127 = por %p125, %p126
      %p128 = scmp.ne.s32.totalorder %s119, %s120
      %p129 = scmp.eq.s32.totalorder %s25, 0
      %p130 = por %p128, %p129
      %p131 = scmp.ne.s32.totalorder %s119, %s120
      %p132 = scmp.eq.s32.totalorder %s26, 1
      %p133 = por %p131, %p132
      %p135 = scmp.ne.s32.totalorder %s120, %s134
      %p136 = scmp.eq.s32.totalorder %s26, 0
      %p137 = por %p135, %p136
      %s139 = sadd.s32 %s138, 1
      %p142 = scmp.eq.s32.totalorder %s20, 1
      %p143 = scmp.ne.s32.totalorder %s138, %s140
      %p144 = scmp.eq.s32.totalorder %s20, 0
      %p145 = por %p143, %p144
      %p146 = scmp.ne.s32.totalorder %s138, %s140
      %p147 = scmp.eq.s32.totalorder %s25, 1
      %p148 = por %p146, %p147
      %p149 = scmp.ne.s32.totalorder %s140, %s141
      %p150 = scmp.eq.s32.totalorder %s25, 0
      %p151 = por %p149, %p150
      %p152 = scmp.ne.s32.totalorder %s140, %s141
      %p153 = scmp.eq.s32.totalorder %s26, 1
      %p154 = por %p152, %p153
      %p156 = scmp.ne.s32.totalorder %s141, %s155
      %p157 = scmp.eq.s32.totalorder %s26, 0
      %p158 = por %p156, %p157
      %s160 = sadd.s32 %s159, 1
      %p163 = scmp.eq.s32.totalorder %s20, 1
      %p164 = scmp.ne.s32.totalorder %s159, %s161
      %p165 = scmp.eq.s32.totalorder %s20, 0
      %p166 = por %p164, %p165
      %p167 = scmp.ne.s32.totalorder %s159, %s161
      %p168 = scmp.eq.s32.totalorder %s25, 1
      %p169 = por %p167, %p168
      %p170 = scmp.ne.s32.totalorder %s161, %s162
      %p171 = scmp.eq.s32.totalorder %s25, 0
      %p172 = por %p170, %p171
      %p173 = scmp.ne.s32.totalorder %s161, %s162
      %p174 = scmp.eq.s32.totalorder %s26, 1
      %p175 = por %p173, %p174
      %p177 = scmp.ne.s32.totalorder %s162, %s176
      %p178 = scmp.eq.s32.totalorder %s26, 0
      %p179 = por %p177, %p178
      %s181 = sadd.s32 %s180, 1
      %p184 = scmp.eq.s32.totalorder %s20, 1
      %p185 = scmp.ne.s32.totalorder %s180, %s182
      %p186 = scmp.eq.s32.totalorder %s20, 0
      %p187 = por %p185, %p186
      %p188 = scmp.ne.s32.totalorder %s180, %s182
      %p189 = scmp.eq.s32.totalorder %s25, 1
      %p190 = por %p188, %p189
      %p191 = scmp.ne.s32.totalorder %s182, %s183
      %p192 = scmp.eq.s32.totalorder %s25, 0
      %p193 = por %p191, %p192
      %p194 = scmp.ne.s32.totalorder %s182, %s183
      %p195 = scmp.eq.s32.totalorder %s26, 1
      %p196 = por %p194, %p195
      %p198 = scmp.ne.s32.totalorder %s183, %s197
      %p199 = scmp.eq.s32.totalorder %s26, 0
      %p200 = por %p198, %p199
      %s202 = sadd.s32 %s201, 1
      %p205 = scmp.eq.s32.totalorder %s20, 1
      %p206 = scmp.ne.s32.totalorder %s201, %s203
      %p207 = scmp.eq.s32.totalorder %s20, 0
      %p208 = por %p206, %p207
      %p209 = scmp.ne.s32.totalorder %s201, %s203
      %p210 = scmp.eq.s32.totalorder %s25, 1
      %p211 = por %p209, %p210
      %p212 = scmp.ne.s32.totalorder %s203, %s204
      %p213 = scmp.eq.s32.totalorder %s25, 0
      %p214 = por %p212, %p213
      %p215 = scmp.ne.s32.totalorder %s203, %s204
      %p216 = scmp.eq.s32.totalorder %s26, 1
      %p217 = por %p215, %p216
      %p219 = scmp.ne.s32.totalorder %s204, %s218
      %p220 = scmp.eq.s32.totalorder %s26, 0
      %p221 = por %p219, %p220
      %s222 = ssub.s32 %s20, %s27
      %p223 = scmp.eq.s32.totalorder %s222, 0
      %s225 = sadd.s32 %s224, 1
      %s226 = scalar_select %p223, %s224, %s225
      %p229 = pneg %p223
      %p230 = scmp.eq.s32.totalorder %s20, 1
      %p231 = por %p229, %p230
      %p232 = scmp.ne.s32.totalorder %s224, %s227
      %p233 = scmp.eq.s32.totalorder %s20, 0
      %p234 = por %p232, %p233
      %p235 = scmp.ne.s32.totalorder %s224, %s227
      %p236 = scmp.eq.s32.totalorder %s25, 1
      %p237 = por %p235, %p236
      %p238 = scmp.ne.s32.totalorder %s227, %s228
      %p239 = scmp.eq.s32.totalorder %s25, 0
      %p240 = por %p238, %p239
      %p241 = scmp.ne.s32.totalorder %s227, %s228
      %p242 = scmp.eq.s32.totalorder %s26, 1
      %p243 = por %p241, %p242
      %p245 = scmp.ne.s32.totalorder %s228, %s244
      %p246 = scmp.eq.s32.totalorder %s26, 0
      %p247 = por %p245, %p246
      %p248 = scmp.le.s32.totalorder 1, %s20
      %p249 = scmp.lt.s32.totalorder %s20, 3
      %p250 = pnand %p248, %p249
      %p251 = pneg %p250
      // Predicated region
      $region9: #{episode_forward.7} parent=5 // pred_check
        _
      $region10: #{episode_forward.7} parent=5 // pred_check_branch
        %253 = sbr.rel (%p250) target = $region12
      $region11: #{episode_forward.7} parent=5 // pred_region
        %s254 = ssub.s32 %s20, 1
        // Predicated region
        $region13: #{episode_forward.7} parent=11 // pred_check
          %p255 = pneg %p67
        $region14: #{episode_forward.7} parent=11 // pred_check_branch
          %257 = sbr.rel (%p255) target = $region16
        $region15: #{episode_forward.7} parent=11 // pred_region
          _
        $region16: #{episode_forward.7} parent=11 // pred_fallthru
          _
        // Predicated region
        $region17: #{episode_forward.7} parent=11 // pred_check
          %p258 = pneg %p88
        $region18: #{episode_forward.7} parent=11 // pred_check_branch
          %260 = sbr.rel (%p258) target = $region20
        $region19: #{episode_forward.7} parent=11 // pred_region
          _
        $region20: #{episode_forward.7} parent=11 // pred_fallthru
          _
        // Predicated region
        $region21: #{episode_forward.7} parent=11 // pred_check
          %p261 = pneg %p109
        $region22: #{episode_forward.7} parent=11 // pred_check_branch
          %263 = sbr.rel (%p261) target = $region24
        $region23: #{episode_forward.7} parent=11 // pred_region
          _
        $region24: #{episode_forward.7} parent=11 // pred_fallthru
          _
        // Predicated region
        $region25: #{episode_forward.7} parent=11 // pred_check
          %p264 = pneg %p130
        $region26: #{episode_forward.7} parent=11 // pred_check_branch
          %266 = sbr.rel (%p264) target = $region28
        $region27: #{episode_forward.7} parent=11 // pred_region
          _
        $region28: #{episode_forward.7} parent=11 // pred_fallthru
          _
        // Predicated region
        $region29: #{episode_forward.7} parent=11 // pred_check
          %p267 = pneg %p151
        $region30: #{episode_forward.7} parent=11 // pred_check_branch
          %269 = sbr.rel (%p267) target = $region32
        $region31: #{episode_forward.7} parent=11 // pred_region
          _
        $region32: #{episode_forward.7} parent=11 // pred_fallthru
          _
        // Predicated region
        $region33: #{episode_forward.7} parent=11 // pred_check
          %p270 = pneg %p172
        $region34: #{episode_forward.7} parent=11 // pred_check_branch
          %272 = sbr.rel (%p270) target = $region36
        $region35: #{episode_forward.7} parent=11 // pred_region
          _
        $region36: #{episode_forward.7} parent=11 // pred_fallthru
          _
        // Predicated region
        $region37: #{episode_forward.7} parent=11 // pred_check
          %p273 = pneg %p193
        $region38: #{episode_forward.7} parent=11 // pred_check_branch
          %275 = sbr.rel (%p273) target = $region40
        $region39: #{episode_forward.7} parent=11 // pred_region
          _
        $region40: #{episode_forward.7} parent=11 // pred_fallthru
          _
        // Predicated region
        $region41: #{episode_forward.7} parent=11 // pred_check
          %p276 = pneg %p214
        $region42: #{episode_forward.7} parent=11 // pred_check_branch
          %278 = sbr.rel (%p276) target = $region44
        $region43: #{episode_forward.7} parent=11 // pred_region
          _
        $region44: #{episode_forward.7} parent=11 // pred_fallthru
          _
      $region12: #{episode_forward.7} parent=5 // pred_fallthru
        _
      %p279 = scmp.lt.s32.totalorder %s20, 2
      // Predicated region
      $region45: #{episode_forward.7} parent=5 // pred_check
        %p280 = pneg %p279
      $region46: #{episode_forward.7} parent=5 // pred_check_branch
        %282 = sbr.rel (%p280) target = $region48
      $region47: #{episode_forward.7} parent=5 // pred_region
        // Predicated region
        $region49: #{episode_forward.7} parent=47 // pred_check
          %p283 = pneg %p40
        $region50: #{episode_forward.7} parent=47 // pred_check_branch
          %285 = sbr.rel (%p283) target = $region52
        $region51: #{episode_forward.7} parent=47 // pred_region
          %p286 = scmp.lt.s32.totalorder %s20, 1
          %s287 = scalar_select %p286, %s20, 1
          %s288 = smul.addr %s287, 8
          %s289 = smul.addr %s288, 8
          %s290 = scalar_lea.vmem %s0, %s289
        $region52: #{episode_forward.7} parent=47 // pred_fallthru
          _
      $region48: #{episode_forward.7} parent=5 // pred_fallthru
        _
      %p291 = scmp.le.s32.totalorder 1, %s20
      %p292 = scmp.lt.s32.totalorder %s20, 3
      %p293 = pnand %p291, %p292
      %p294 = pneg %p293
      // Predicated region
      $region53: #{episode_forward.7} parent=5 // pred_check
        _
      $region54: #{episode_forward.7} parent=5 // pred_check_branch
        %296 = sbr.rel (%p293) target = $region56
      $region55: #{episode_forward.7} parent=5 // pred_region
        %s297 = ssub.s32 %s20, 1
        %p298 = scmp.lt.s32.totalorder %s25, 1
        %s299 = scalar_select %p298, %s25, 1
        %s300 = smul.addr %s299, 8
        %s301 = smul.addr %s300, 8
        %s302 = scalar_lea.vmem %s0, %s301
        %p303 = pneg %p46
        %p304 = pneg %p43
        %p305 = pneg %p67
        %p306 = pneg %p64
        %p307 = pneg %p88
        %p308 = pneg %p85
        %p309 = pneg %p109
        %p310 = pneg %p106
        %p311 = pneg %p130
        %p312 = pneg %p127
        %p313 = pneg %p151
        %p314 = pneg %p148
        %p315 = pneg %p172
        %p316 = pneg %p169
        %p317 = pneg %p193
        %p318 = pneg %p190
        %p319 = pneg %p214
        %p320 = pneg %p211
        %p321 = pneg %p240
        %p322 = pneg %p237
        %s323 = sand.u32 %s227, 1
        %s324 = scalar_lea.sflag [#allocation5], %s323
        %s325 = sand.u32 %s227, 1
        %s326 = scalar_lea.vmem [#allocation4], %s325
        %p327 = scmp.lt.s32.totalorder %s25, 1
        %s328 = scalar_select %p327, %s25, 1
        %s329 = smul.addr %s328, 8
        %s330 = smul.addr %s329, 8
        %s331 = scalar_lea.vmem %s0, %s330
        %p332 = scmp.eq.s32.totalorder %s25, 0
        // Predicated region
        $region57: #{episode_forward.7} parent=55 // pred_check
          %p333 = pneg %p332
        $region58: #{episode_forward.7} parent=55 // pred_check_branch
          %335 = sbr.rel (%p333) target = $region60
        $region59: #{episode_forward.7} parent=55 // pred_region
          %v336 = vld [vmem:[%s1] sm:$0xff]
          %v337 = vld [vmem:[%s1 + $0x8] sm:$0xff]
          %v338 = vld [vmem:[%s1 + $0x10] sm:$0xff]
          %v339 = vld [vmem:[%s1 + $0x18] sm:$0xff]
          %vm340 = vcmask 7168
          %341 = vst.msk [vmem:[#allocation2] sm:$0xff] %vm340, %v336
          %342 = vst.msk [vmem:[#allocation2 + $0x8] sm:$0xff] %vm340, %v337
          %343 = vst.msk [vmem:[#allocation2 + $0x10] sm:$0xff] %vm340, %v338
          %344 = vst.msk [vmem:[#allocation2 + $0x18] sm:$0xff] %vm340, %v339
        $region60: #{episode_forward.7} parent=55 // pred_fallthru
          _
        %v345 = vld [vmem:[%s331] sm:$0xff]
        %v346 = vld [vmem:[%s331 + $0x8] sm:$0xff]
        %v347 = vld [vmem:[%s331 + $0x10] sm:$0xff]
        %v348 = vld [vmem:[%s331 + $0x18] sm:$0xff]
        %v349 = vld [vmem:[%s331 + $0x20] sm:$0xff]
        %v350 = vld [vmem:[%s331 + $0x28] sm:$0xff]
        %v351 = vld [vmem:[%s331 + $0x30] sm:$0xff]
        %v352 = vld [vmem:[%s331 + $0x38] sm:$0xff]
        %v353 = vmax.f32 %v345, 0.0
        %v354 = vmax.f32 %v346, 0.0
        %v355 = vmax.f32 %v347, 0.0
        %v356 = vmax.f32 %v348, 0.0
        %v357 = vmax.f32 %v349, 0.0
        %v358 = vmax.f32 %v350, 0.0
        %v359 = vmax.f32 %v351, 0.0
        %v360 = vmax.f32 %v352, 0.0
        %v361 = vld [vmem:[%s2] sm:$0xff]
        %v362 = vld [vmem:[%s2 + $0x8] sm:$0xff]
        %v363 = vld [vmem:[%s2 + $0x10] sm:$0xff]
        %v364 = vld [vmem:[%s2 + $0x18] sm:$0xff]
        %v365 = vld [vmem:[%s3] sm:$0xff]
        %v366 = vld [vmem:[%s3 + $0x8] sm:$0xff]
        %v367 = vld [vmem:[%s3 + $0x10] sm:$0xff]
        %v368 = vld [vmem:[%s3 + $0x18] sm:$0xff]
        %370 = vset.pattern.permute.xlu0 0
        %371 = vperm.xlu0 %370, %v365
        %v372 = vpop.permute.xlu0 %371
        %375 = vset.pattern.permute.xlu0 0
        %376 = vperm.xlu0 %375, %v366
        %v377 = vpop.permute.xlu0 %376
        %380 = vset.pattern.permute.xlu0 0
        %381 = vperm.xlu0 %380, %v367
        %v382 = vpop.permute.xlu0 %381
        %385 = vset.pattern.permute.xlu0 0
        %386 = vperm.xlu0 %385, %v368
        %v387 = vpop.permute.xlu0 %386
        %vm389 = vcmask 523264
        %v391 = vsel %vm389, %v361, 0
        %v394 = vsel %vm389, %v362, 0
        %v397 = vsel %vm389, %v363, 0
        %v400 = vsel %vm389, %v364, 0
        %402 = vmatprep.subr.mxu0 0.0
        %403 = vmatpush1.msra.mxu0 %v353
        %404 = vmatprep.subr.mxu0 0.0
        %405 = vmatpush1.msra.mxu0 %v354
        %406 = vmatprep.subr.mxu0 0.0
        %407 = vmatpush1.msra.mxu0 %v355
        %408 = vmatprep.subr.mxu0 0.0
        %409 = vmatpush1.msra.mxu0 %v356
        %410 = vmatprep.subr.mxu0 0.0
        %411 = vmatpush1.msra.mxu0 %v357
        %412 = vmatprep.subr.mxu0 0.0
        %413 = vmatpush1.msra.mxu0 %v358
        %414 = vmatprep.subr.mxu0 0.0
        %415 = vmatpush1.msra.mxu0 %v359
        %416 = vmatprep.subr.mxu0 0.0
        %417 = vmatpush1.msra.mxu0 %v360
        %418 = vmatprep.subr.mxu0 0.0
        %419 = vmatpush1.msra.mxu0 0.0
        %420 = vmatprep.subr.mxu0 0.0
        %421 = vmatpush1.msra.mxu0 0.0
        %422 = vmatprep.subr.mxu0 0.0
        %423 = vmatpush1.msra.mxu0 0.0
        %424 = vmatprep.subr.mxu0 0.0
        %425 = vmatpush1.msra.mxu0 0.0
        %426 = vmatprep.subr.mxu0 0.0
        %427 = vmatpush1.msra.mxu0 0.0
        %428 = vmatprep.subr.mxu0 0.0
        %429 = vmatpush1.msra.mxu0 0.0
        %430 = vmatprep.subr.mxu0 0.0
        %431 = vmatpush1.msra.mxu0 0.0
        %432 = vmatprep.subr.mxu0 0.0
        %433 = vmatpush1.msra.mxu0 0.0
        %434 = vmatprep.subr.mxu0 0.0
        %435 = vmatpush1.msra.mxu0 0.0
        %436 = vmatprep.subr.mxu0 0.0
        %437 = vmatpush1.msra.mxu0 0.0
        %438 = vmatprep.subr.mxu0 0.0
        %439 = vmatpush1.msra.mxu0 0.0
        %440 = vmatprep.subr.mxu0 0.0
        %441 = vmatpush1.msra.mxu0 0.0
        %442 = vmatprep.subr.mxu0 0.0
        %443 = vmatpush1.msra.mxu0 0.0
        %444 = vmatprep.subr.mxu0 0.0
        %445 = vmatpush1.msra.mxu0 0.0
        %446 = vmatprep.subr.mxu0 0.0
        %447 = vmatpush1.msra.mxu0 0.0
        %448 = vmatprep.subr.mxu0 0.0
        %449 = vmatpush1.msra.mxu0 0.0
        %450 = vmatprep.subr.mxu0 0.0
        %451 = vmatpush1.msra.mxu0 0.0
        %452 = vmatprep.subr.mxu0 0.0
        %453 = vmatpush1.msra.mxu0 0.0
        %454 = vmatprep.subr.mxu0 0.0
        %455 = vmatpush1.msra.mxu0 0.0
        %456 = vmatprep.subr.mxu0 0.0
        %457 = vmatpush1.msra.mxu0 0.0
        %458 = vmatprep.subr.mxu0 0.0
        %459 = vmatpush1.msra.mxu0 0.0
        %460 = vmatprep.subr.mxu0 0.0
        %461 = vmatpush1.msra.mxu0 0.0
        %462 = vmatprep.subr.mxu0 0.0
        %463 = vmatpush1.msra.mxu0 0.0
        %464 = vmatprep.subr.mxu0 0.0
        %465 = vmatpush1.msra.mxu0 0.0
        %466 = vmatprep.mubr.f32.mxu0 0.0
        %467 = vmatmul.mubr.f32.gmra.mrb[0].mxu0 %v391
        %v468 = vpop.f32.mrb[0].mxu0
        %v469 = vadd.f32 %v372, %v468
        %v470 = vpop.f32.mrb[0].mxu0
        %471 = vmatprep.mubr.f32.mxu0 0.0
        %472 = vmatmul.mubr.f32.gmra.mrb[0].mxu0 %v394
        %v473 = vpop.f32.mrb[0].mxu0
        %v474 = vadd.f32 %v377, %v473
        %v475 = vpop.f32.mrb[0].mxu0
        %476 = vmatprep.mubr.f32.mxu0 0.0
        %477 = vmatmul.mubr.f32.gmra.mrb[0].mxu0 %v397
        %v478 = vpop.f32.mrb[0].mxu0
        %v479 = vadd.f32 %v382, %v478
        %v480 = vpop.f32.mrb[0].mxu0
        %481 = vmatprep.mubr.f32.mxu0 0.0
        %482 = vmatmul.mubr.f32.gmra.mrb[0].mxu0 %v400
        %v483 = vpop.f32.mrb[0].mxu0
        %v484 = vadd.f32 %v387, %v483
        %v485 = vpop.f32.mrb[0].mxu0
        %486 = vdwg.mxu0
        %v487 = vld [vmem:[%s4] sm:$0xff]
        %v488 = vld [vmem:[%s4 + $0x8] sm:$0xff]
        %v489 = vld [vmem:[%s4 + $0x10] sm:$0xff]
        %v490 = vld [vmem:[%s4 + $0x18] sm:$0xff]
        %v491 = vld [vmem:[%s4 + $0x20] sm:$0xff]
        %v492 = vld [vmem:[%s4 + $0x28] sm:$0xff]
        %v493 = vld [vmem:[%s4 + $0x30] sm:$0xff]
        %v494 = vld [vmem:[%s4 + $0x38] sm:$0xff]
        %v495 = vld [vmem:[%s4 + $0x40] sm:$0xff]
        %v496 = vld [vmem:[%s4 + $0x48] sm:$0xff]
        %v497 = vld [vmem:[%s4 + $0x50] sm:$0xff]
        %v498 = vld [vmem:[%s4 + $0x58] sm:$0xff]
        %v499 = vld [vmem:[%s4 + $0x60] sm:$0xff]
        %v500 = vld [vmem:[%s4 + $0x68] sm:$0xff]
        %v501 = vld [vmem:[%s4 + $0x70] sm:$0xff]
        %v502 = vld [vmem:[%s4 + $0x78] sm:$0xff]
        %v503 = vld [vmem:[%s4 + $0x80] sm:$0xff]
        %v504 = vld [vmem:[%s4 + $0x88] sm:$0xff]
        %v505 = vld [vmem:[%s4 + $0x90] sm:$0xff]
        %v506 = vld [vmem:[%s4 + $0x98] sm:$0xff]
        %v507 = vld [vmem:[%s4 + $0xa0] sm:$0xff]
        %v508 = vld [vmem:[%s4 + $0xa8] sm:$0xff]
        %v509 = vld [vmem:[%s4 + $0xb0] sm:$0xff]
        %v510 = vld [vmem:[%s4 + $0xb8] sm:$0xff]
        %v511 = vld [vmem:[%s4 + $0xc0] sm:$0xff]
        %v512 = vld [vmem:[%s4 + $0xc8] sm:$0xff]
        %v513 = vld [vmem:[%s4 + $0xd0] sm:$0xff]
        %v514 = vld [vmem:[%s4 + $0xd8] sm:$0xff]
        %v515 = vld [vmem:[%s4 + $0xe0] sm:$0xff]
        %v516 = vld [vmem:[%s4 + $0xe8] sm:$0xff]
        %v517 = vld [vmem:[%s4 + $0xf0] sm:$0xff]
        %v518 = vld [vmem:[%s4 + $0xf8] sm:$0xff]
        %v519 = vld [vmem:[%s5] sm:$0xff]
        %v520 = vld [vmem:[%s5 + $0x8] sm:$0xff]
        %v521 = vld [vmem:[%s5 + $0x10] sm:$0xff]
        %v522 = vld [vmem:[%s5 + $0x18] sm:$0xff]
        %v523 = vld [vmem:[%s5 + $0x20] sm:$0xff]
        %v524 = vld [vmem:[%s5 + $0x28] sm:$0xff]
        %v525 = vld [vmem:[%s5 + $0x30] sm:$0xff]
        %v526 = vld [vmem:[%s5 + $0x38] sm:$0xff]
        %v527 = vld [vmem:[%s5 + $0x40] sm:$0xff]
        %v528 = vld [vmem:[%s5 + $0x48] sm:$0xff]
        %v529 = vld [vmem:[%s5 + $0x50] sm:$0xff]
        %v530 = vld [vmem:[%s5 + $0x58] sm:$0xff]
        %v531 = vld [vmem:[%s5 + $0x60] sm:$0xff]
        %v532 = vld [vmem:[%s5 + $0x68] sm:$0xff]
        %v533 = vld [vmem:[%s5 + $0x70] sm:$0xff]
        %v534 = vld [vmem:[%s5 + $0x78] sm:$0xff]
        %v535 = vld [vmem:[%s5 + $0x80] sm:$0xff]
        %v536 = vld [vmem:[%s5 + $0x88] sm:$0xff]
        %v537 = vld [vmem:[%s5 + $0x90] sm:$0xff]
        %v538 = vld [vmem:[%s5 + $0x98] sm:$0xff]
        %v539 = vld [vmem:[%s5 + $0xa0] sm:$0xff]
        %v540 = vld [vmem:[%s5 + $0xa8] sm:$0xff]
        %v541 = vld [vmem:[%s5 + $0xb0] sm:$0xff]
        %v542 = vld [vmem:[%s5 + $0xb8] sm:$0xff]
        %v543 = vld [vmem:[%s5 + $0xc0] sm:$0xff]
        %v544 = vld [vmem:[%s5 + $0xc8] sm:$0xff]
        %v545 = vld [vmem:[%s5 + $0xd0] sm:$0xff]
        %v546 = vld [vmem:[%s5 + $0xd8] sm:$0xff]
        %v547 = vld [vmem:[%s5 + $0xe0] sm:$0xff]
        %v548 = vld [vmem:[%s5 + $0xe8] sm:$0xff]
        %v549 = vld [vmem:[%s5 + $0xf0] sm:$0xff]
        %v550 = vld [vmem:[%s5 + $0xf8] sm:$0xff]
        %v551 = vld [vmem:[#allocation2] sm:$0xff]
        %v552 = vld [vmem:[#allocation2 + $0x8] sm:$0xff]
        %v553 = vld [vmem:[#allocation2 + $0x10] sm:$0xff]
        %v554 = vld [vmem:[#allocation2 + $0x18] sm:$0xff]
        %vm555 = vcmask 261120
        %v557 = vsel %vm555, %v519, 0
        %v560 = vsel %vm555, %v520, 0
        %v563 = vsel %vm555, %v521, 0
        %v566 = vsel %vm555, %v522, 0
        %v569 = vsel %vm555, %v523, 0
        %v572 = vsel %vm555, %v524, 0
        %v575 = vsel %vm555, %v525, 0
        %v578 = vsel %vm555, %v526, 0
        %v581 = vsel %vm555, %v527, 0
        %v584 = vsel %vm555, %v528, 0
        %v587 = vsel %vm555, %v529, 0
        %v590 = vsel %vm555, %v530, 0
        %v593 = vsel %vm555, %v531, 0
        %v596 = vsel %vm555, %v532, 0
        %v599 = vsel %vm555, %v533, 0
        %v602 = vsel %vm555, %v534, 0
        %v605 = vsel %vm555, %v535, 0
        %v608 = vsel %vm555, %v536, 0
        %v611 = vsel %vm555, %v537, 0
        %v614 = vsel %vm555, %v538, 0
        %v617 = vsel %vm555, %v539, 0
        %v620 = vsel %vm555, %v540, 0
        %v623 = vsel %vm555, %v541, 0
        %v626 = vsel %vm555, %v542, 0
        %v629 = vsel %vm555, %v543, 0
        %v632 = vsel %vm555, %v544, 0
        %v635 = vsel %vm555, %v545, 0
        %v638 = vsel %vm555, %v546, 0
        %v641 = vsel %vm555, %v547, 0
        %v644 = vsel %vm555, %v548, 0
        %v647 = vsel %vm555, %v549, 0
        %v650 = vsel %vm555, %v550, 0
        %652 = vmatprep.subr.mxu0 0.0
        %653 = vmatpush1.msra.mxu0 %v551
        %654 = vmatprep.subr.mxu0 0.0
        %655 = vmatpush1.msra.mxu0 %v552
        %656 = vmatprep.subr.mxu0 0.0
        %657 = vmatpush1.msra.mxu0 %v553
        %658 = vmatprep.subr.mxu0 0.0
        %659 = vmatpush1.msra.mxu0 %v554
        %660 = vmatprep.subr.mxu0 0.0
        %661 = vmatpush1.msra.mxu0 0.0
        %662 = vmatprep.subr.mxu0 0.0
        %663 = vmatpush1.msra.mxu0 0.0
        %664 = vmatprep.subr.mxu0 0.0
        %665 = vmatpush1.msra.mxu0 0.0
        %666 = vmatprep.subr.mxu0 0.0
        %667 = vmatpush1.msra.mxu0 0.0
        %668 = vmatprep.subr.mxu0 0.0
        %669 = vmatpush1.msra.mxu0 0.0
        %670 = vmatprep.subr.mxu0 0.0
        %671 = vmatpush1.msra.mxu0 0.0
        %672 = vmatprep.subr.mxu0 0.0
        %673 = vmatpush1.msra.mxu0 0.0
        %674 = vmatprep.subr.mxu0 0.0
        %675 = vmatpush1.msra.mxu0 0.0
        %676 = vmatprep.subr.mxu0 0.0
        %677 = vmatpush1.msra.mxu0 0.0
        %678 = vmatprep.subr.mxu0 0.0
        %679 = vmatpush1.msra.mxu0 0.0
        %680 = vmatprep.subr.mxu0 0.0
        %681 = vmatpush1.msra.mxu0 0.0
        %682 = vmatprep.subr.mxu0 0.0
        %683 = vmatpush1.msra.mxu0 0.0
        %684 = vmatprep.subr.mxu0 0.0
        %685 = vmatpush1.msra.mxu0 0.0
        %686 = vmatprep.subr.mxu0 0.0
        %687 = vmatpush1.msra.mxu0 0.0
        %688 = vmatprep.subr.mxu0 0.0
        %689 = vmatpush1.msra.mxu0 0.0
        %690 = vmatprep.subr.mxu0 0.0
        %691 = vmatpush1.msra.mxu0 0.0
        %692 = vmatprep.subr.mxu0 0.0
        %693 = vmatpush1.msra.mxu0 0.0
        %694 = vmatprep.subr.mxu0 0.0
        %695 = vmatpush1.msra.mxu0 0.0
        %696 = vmatprep.subr.mxu0 0.0
        %697 = vmatpush1.msra.mxu0 0.0
        %698 = vmatprep.subr.mxu0 0.0
        %699 = vmatpush1.msra.mxu0 0.0
        %700 = vmatprep.subr.mxu0 0.0
        %701 = vmatpush1.msra.mxu0 0.0
        %702 = vmatprep.subr.mxu0 0.0
        %703 = vmatpush1.msra.mxu0 0.0
        %704 = vmatprep.subr.mxu0 0.0
        %705 = vmatpush1.msra.mxu0 0.0
        %706 = vmatprep.subr.mxu0 0.0
        %707 = vmatpush1.msra.mxu0 0.0
        %708 = vmatprep.subr.mxu0 0.0
        %709 = vmatpush1.msra.mxu0 0.0
        %710 = vmatprep.subr.mxu0 0.0
        %711 = vmatpush1.msra.mxu0 0.0
        %712 = vmatprep.subr.mxu0 0.0
        %713 = vmatpush1.msra.mxu0 0.0
        %714 = vmatprep.subr.mxu0 0.0
        %715 = vmatpush1.msra.mxu0 0.0
        %716 = vmatprep.mubr.f32.mxu0 0.0
        %717 = vmatmul.mubr.f32.gmra.mrb[0].mxu0 %v557
        %v718 = vpop.f32.mrb[0].mxu0
        %v719 = vadd.f32 0.0, %v718
        %v720 = vpop.f32.mrb[0].mxu0
        %721 = vmatprep.mubr.f32.mxu0 0.0
        %722 = vmatmul.mubr.f32.gmra.mrb[0].mxu0 %v560
        %v723 = vpop.f32.mrb[0].mxu0
        %v724 = vadd.f32 0.0, %v723
        %v725 = vpop.f32.mrb[0].mxu0
        %726 = vmatprep.mubr.f32.mxu0 0.0
        %727 = vmatmul.mubr.f32.gmra.mrb[0].mxu0 %v563
        %v728 = vpop.f32.mrb[0].mxu0
        %v729 = vadd.f32 0.0, %v728
        %v730 = vpop.f32.mrb[0].mxu0
        %731 = vmatprep.mubr.f32.mxu0 0.0
        %732 = vmatmul.mubr.f32.gmra.mrb[0].mxu0 %v566
        %v733 = vpop.f32.mrb[0].mxu0
        %v734 = vadd.f32 0.0, %v733
        %v735 = vpop.f32.mrb[0].mxu0
        %736 = vmatprep.mubr.f32.mxu0 0.0
        %737 = vmatmul.mubr.f32.gmra.mrb[0].mxu0 %v569
        %v738 = vpop.f32.mrb[0].mxu0
        %v739 = vadd.f32 0.0, %v738
        %v740 = vpop.f32.mrb[0].mxu0
        %741 = vmatprep.mubr.f32.mxu0 0.0
        %742 = vmatmul.mubr.f32.gmra.mrb[0].mxu0 %v572
        %v743 = vpop.f32.mrb[0].mxu0
        %v744 = vadd.f32 0.0, %v743
        %v745 = vpop.f32.mrb[0].mxu0
        %746 = vmatprep.mubr.f32.mxu0 0.0
        %747 = vmatmul.mubr.f32.gmra.mrb[0].mxu0 %v575
        %v748 = vpop.f32.mrb[0].mxu0
        %v749 = vadd.f32 0.0, %v748
        %v750 = vpop.f32.mrb[0].mxu0
        %751 = vmatprep.mubr.f32.mxu0 0.0
        %752 = vmatmul.mubr.f32.gmra.mrb[0].mxu0 %v578
        %v753 = vpop.f32.mrb[0].mxu0
        %v754 = vadd.f32 0.0, %v753
        %v755 = vpop.f32.mrb[0].mxu0
        %756 = vmatprep.mubr.f32.mxu0 0.0
        %757 = vmatmul.mubr.f32.gmra.mrb[0].mxu0 %v581
        %v758 = vpop.f32.mrb[0].mxu0
        %v759 = vadd.f32 0.0, %v758
        %v760 = vpop.f32.mrb[0].mxu0
        %761 = vmatprep.mubr.f32.mxu0 0.0
        %762 = vmatmul.mubr.f32.gmra.mrb[0].mxu0 %v584
        %v763 = vpop.f32.mrb[0].mxu0
        %v764 = vadd.f32 0.0, %v763
        %v765 = vpop.f32.mrb[0].mxu0
        %766 = vmatprep.mubr.f32.mxu0 0.0
        %767 = vmatmul.mubr.f32.gmra.mrb[0].mxu0 %v587
        %v768 = vpop.f32.mrb[0].mxu0
        %v769 = vadd.f32 0.0, %v768
        %v770 = vpop.f32.mrb[0].mxu0
        %771 = vmatprep.mubr.f32.mxu0 0.0
        %772 = vmatmul.mubr.f32.gmra.mrb[0].mxu0 %v590
        %v773 = vpop.f32.mrb[0].mxu0
        %v774 = vadd.f32 0.0, %v773
        %v775 = vpop.f32.mrb[0].mxu0
        %776 = vmatprep.mubr.f32.mxu0 0.0
        %777 = vmatmul.mubr.f32.gmra.mrb[0].mxu0 %v593
        %v778 = vpop.f32.mrb[0].mxu0
        %v779 = vadd.f32 0.0, %v778
        %v780 = vpop.f32.mrb[0].mxu0
        %781 = vmatprep.mubr.f32.mxu0 0.0
        %782 = vmatmul.mubr.f32.gmra.mrb[0].mxu0 %v596
        %v783 = vpop.f32.mrb[0].mxu0
        %v784 = vadd.f32 0.0, %v783
        %v785 = vpop.f32.mrb[0].mxu0
        %786 = vmatprep.mubr.f32.mxu0 0.0
        %787 = vmatmul.mubr.f32.gmra.mrb[0].mxu0 %v599
        %v788 = vpop.f32.mrb[0].mxu0
        %v789 = vadd.f32 0.0, %v788
        %v790 = vpop.f32.mrb[0].mxu0
        %791 = vmatprep.mubr.f32.mxu0 0.0
        %792 = vmatmul.mubr.f32.gmra.mrb[0].mxu0 %v602
        %v793 = vpop.f32.mrb[0].mxu0
        %v794 = vadd.f32 0.0, %v793
        %v795 = vpop.f32.mrb[0].mxu0
        %796 = vmatprep.mubr.f32.mxu0 0.0
        %797 = vmatmul.mubr.f32.gmra.mrb[0].mxu0 %v605
        %v798 = vpop.f32.mrb[0].mxu0
        %v799 = vadd.f32 0.0, %v798
        %v800 = vpop.f32.mrb[0].mxu0
        %801 = vmatprep.mubr.f32.mxu0 0.0
        %802 = vmatmul.mubr.f32.gmra.mrb[0].mxu0 %v608
        %v803 = vpop.f32.mrb[0].mxu0
        %v804 = vadd.f32 0.0, %v803
        %v805 = vpop.f32.mrb[0].mxu0
        %806 = vmatprep.mubr.f32.mxu0 0.0
        %807 = vmatmul.mubr.f32.gmra.mrb[0].mxu0 %v611
        %v808 = vpop.f32.mrb[0].mxu0
        %v809 = vadd.f32 0.0, %v808
        %v810 = vpop.f32.mrb[0].mxu0
        %811 = vmatprep.mubr.f32.mxu0 0.0
        %812 = vmatmul.mubr.f32.gmra.mrb[0].mxu0 %v614
        %v813 = vpop.f32.mrb[0].mxu0
        %v814 = vadd.f32 0.0, %v813
        %v815 = vpop.f32.mrb[0].mxu0
        %816 = vmatprep.mubr.f32.mxu0 0.0
        %817 = vmatmul.mubr.f32.gmra.mrb[0].mxu0 %v617
        %v818 = vpop.f32.mrb[0].mxu0
        %v819 = vadd.f32 0.0, %v818
        %v820 = vpop.f32.mrb[0].mxu0
        %821 = vmatprep.mubr.f32.mxu0 0.0
        %822 = vmatmul.mubr.f32.gmra.mrb[0].mxu0 %v620
        %v823 = vpop.f32.mrb[0].mxu0
        %v824 = vadd.f32 0.0, %v823
        %v825 = vpop.f32.mrb[0].mxu0
        %826 = vmatprep.mubr.f32.mxu0 0.0
        %827 = vmatmul.mubr.f32.gmra.mrb[0].mxu0 %v623
        %v828 = vpop.f32.mrb[0].mxu0
        %v829 = vadd.f32 0.0, %v828
        %v830 = vpop.f32.mrb[0].mxu0
        %831 = vmatprep.mubr.f32.mxu0 0.0
        %832 = vmatmul.mubr.f32.gmra.mrb[0].mxu0 %v626
        %v833 = vpop.f32.mrb[0].mxu0
        %v834 = vadd.f32 0.0, %v833
        %v835 = vpop.f32.mrb[0].mxu0
        %836 = vmatprep.mubr.f32.mxu0 0.0
        %837 = vmatmul.mubr.f32.gmra.mrb[0].mxu0 %v629
        %v838 = vpop.f32.mrb[0].mxu0
        %v839 = vadd.f32 0.0, %v838
        %v840 = vpop.f32.mrb[0].mxu0
        %841 = vmatprep.mubr.f32.mxu0 0.0
        %842 = vmatmul.mubr.f32.gmra.mrb[0].mxu0 %v632
        %v843 = vpop.f32.mrb[0].mxu0
        %v844 = vadd.f32 0.0, %v843
        %v845 = vpop.f32.mrb[0].mxu0
        %846 = vmatprep.mubr.f32.mxu0 0.0
        %847 = vmatmul.mubr.f32.gmra.mrb[0].mxu0 %v635
        %v848 = vpop.f32.mrb[0].mxu0
        %v849 = vadd.f32 0.0, %v848
        %v850 = vpop.f32.mrb[0].mxu0
        %851 = vmatprep.mubr.f32.mxu0 0.0
        %852 = vmatmul.mubr.f32.gmra.mrb[0].mxu0 %v638
        %v853 = vpop.f32.mrb[0].mxu0
        %v854 = vadd.f32 0.0, %v853
        %v855 = vpop.f32.mrb[0].mxu0
        %856 = vmatprep.mubr.f32.mxu0 0.0
        %857 = vmatmul.mubr.f32.gmra.mrb[0].mxu0 %v641
        %v858 = vpop.f32.mrb[0].mxu0
        %v859 = vadd.f32 0.0, %v858
        %v860 = vpop.f32.mrb[0].mxu0
        %861 = vmatprep.mubr.f32.mxu0 0.0
        %862 = vmatmul.mubr.f32.gmra.mrb[0].mxu0 %v644
        %v863 = vpop.f32.mrb[0].mxu0
        %v864 = vadd.f32 0.0, %v863
        %v865 = vpop.f32.mrb[0].mxu0
        %866 = vmatprep.mubr.f32.mxu0 0.0
        %867 = vmatmul.mubr.f32.gmra.mrb[0].mxu0 %v647
        %v868 = vpop.f32.mrb[0].mxu0
        %v869 = vadd.f32 0.0, %v868
        %v870 = vpop.f32.mrb[0].mxu0
        %871 = vmatprep.mubr.f32.mxu0 0.0
        %872 = vmatmul.mubr.f32.gmra.mrb[0].mxu0 %v650
        %v873 = vpop.f32.mrb[0].mxu0
        %v874 = vadd.f32 0.0, %v873
        %v875 = vpop.f32.mrb[0].mxu0
        %876 = vdwg.mxu0
        %878 = vset.pattern.permute.xlu0 0
        %879 = vperm.xlu0 %878, %v719
        %v880 = vpop.permute.xlu0 %879
        %883 = vset.pattern.permute.xlu0 0
        %884 = vperm.xlu0 %883, %v724
        %v885 = vpop.permute.xlu0 %884
        %888 = vset.pattern.permute.xlu0 0
        %889 = vperm.xlu0 %888, %v729
        %v890 = vpop.permute.xlu0 %889
        %893 = vset.pattern.permute.xlu0 0
        %894 = vperm.xlu0 %893, %v734
        %v895 = vpop.permute.xlu0 %894
        %898 = vset.pattern.permute.xlu0 0
        %899 = vperm.xlu0 %898, %v739
        %v900 = vpop.permute.xlu0 %899
        %903 = vset.pattern.permute.xlu0 0
        %904 = vperm.xlu0 %903, %v744
        %v905 = vpop.permute.xlu0 %904
        %908 = vset.pattern.permute.xlu0 0
        %909 = vperm.xlu0 %908, %v749
        %v910 = vpop.permute.xlu0 %909
        %913 = vset.pattern.permute.xlu0 0
        %914 = vperm.xlu0 %913, %v754
        %v915 = vpop.permute.xlu0 %914
        %918 = vset.pattern.permute.xlu0 0
        %919 = vperm.xlu0 %918, %v759
        %v920 = vpop.permute.xlu0 %919
        %923 = vset.pattern.permute.xlu0 0
        %924 = vperm.xlu0 %923, %v764
        %v925 = vpop.permute.xlu0 %924
        %928 = vset.pattern.permute.xlu0 0
        %929 = vperm.xlu0 %928, %v769
        %v930 = vpop.permute.xlu0 %929
        %933 = vset.pattern.permute.xlu0 0
        %934 = vperm.xlu0 %933, %v774
        %v935 = vpop.permute.xlu0 %934
        %938 = vset.pattern.permute.xlu0 0
        %939 = vperm.xlu0 %938, %v779
        %v940 = vpop.permute.xlu0 %939
        %943 = vset.pattern.permute.xlu0 0
        %944 = vperm.xlu0 %943, %v784
        %v945 = vpop.permute.xlu0 %944
        %948 = vset.pattern.permute.xlu0 0
        %949 = vperm.xlu0 %948, %v789
        %v950 = vpop.permute.xlu0 %949
        %953 = vset.pattern.permute.xlu0 0
        %954 = vperm.xlu0 %953, %v794
        %v955 = vpop.permute.xlu0 %954
        %958 = vset.pattern.permute.xlu0 0
        %959 = vperm.xlu0 %958, %v799
        %v960 = vpop.permute.xlu0 %959
        %963 = vset.pattern.permute.xlu0 0
        %964 = vperm.xlu0 %963, %v804
        %v965 = vpop.permute.xlu0 %964
        %968 = vset.pattern.permute.xlu0 0
        %969 = vperm.xlu0 %968, %v809
        %v970 = vpop.permute.xlu0 %969
        %973 = vset.pattern.permute.xlu0 0
        %974 = vperm.xlu0 %973, %v814
        %v975 = vpop.permute.xlu0 %974
        %978 = vset.pattern.permute.xlu0 0
        %979 = vperm.xlu0 %978, %v819
        %v980 = vpop.permute.xlu0 %979
        %983 = vset.pattern.permute.xlu0 0
        %984 = vperm.xlu0 %983, %v824
        %v985 = vpop.permute.xlu0 %984
        %988 = vset.pattern.permute.xlu0 0
        %989 = vperm.xlu0 %988, %v829
        %v990 = vpop.permute.xlu0 %989
        %993 = vset.pattern.permute.xlu0 0
        %994 = vperm.xlu0 %993, %v834
        %v995 = vpop.permute.xlu0 %994
        %998 = vset.pattern.permute.xlu0 0
        %999 = vperm.xlu0 %998, %v839
        %v1000 = vpop.permute.xlu0 %999
        %1003 = vset.pattern.permute.xlu0 0
        %1004 = vperm.xlu0 %1003, %v844
        %v1005 = vpop.permute.xlu0 %1004
        %1008 = vset.pattern.permute.xlu0 0
        %1009 = vperm.xlu0 %1008, %v849
        %v1010 = vpop.permute.xlu0 %1009
        %1013 = vset.pattern.permute.xlu0 0
        %1014 = vperm.xlu0 %1013, %v854
        %v1015 = vpop.permute.xlu0 %1014
        %1018 = vset.pattern.permute.xlu0 0
        %1019 = vperm.xlu0 %1018, %v859
        %v1020 = vpop.permute.xlu0 %1019
        %1023 = vset.pattern.permute.xlu0 0
        %1024 = vperm.xlu0 %1023, %v864
        %v1025 = vpop.permute.xlu0 %1024
        %1028 = vset.pattern.permute.xlu0 0
        %1029 = vperm.xlu0 %1028, %v869
        %v1030 = vpop.permute.xlu0 %1029
        %1033 = vset.pattern.permute.xlu0 0
        %1034 = vperm.xlu0 %1033, %v874
        %v1035 = vpop.permute.xlu0 %1034
        %v1038 = vsel %vm555, %v487, 0
        %v1041 = vsel %vm555, %v488, 0
        %v1044 = vsel %vm555, %v489, 0
        %v1047 = vsel %vm555, %v490, 0
        %v1050 = vsel %vm555, %v491, 0
        %v1053 = vsel %vm555, %v492, 0
        %v1056 = vsel %vm555, %v493, 0
        %v1059 = vsel %vm555, %v494, 0
        %v1062 = vsel %vm555, %v495, 0
        %v1065 = vsel %vm555, %v496, 0
        %v1068 = vsel %vm555, %v497, 0
        %v1071 = vsel %vm555, %v498, 0
        %v1074 = vsel %vm555, %v499, 0
        %v1077 = vsel %vm555, %v500, 0
        %v1080 = vsel %vm555, %v501, 0
        %v1083 = vsel %vm555, %v502, 0
        %v1086 = vsel %vm555, %v503, 0
        %v1089 = vsel %vm555, %v504, 0
        %v1092 = vsel %vm555, %v505, 0
        %v1095 = vsel %vm555, %v506, 0
        %v1098 = vsel %vm555, %v507, 0
        %v1101 = vsel %vm555, %v508, 0
        %v1104 = vsel %vm555, %v509, 0
        %v1107 = vsel %vm555, %v510, 0
        %v1110 = vsel %vm555, %v511, 0
        %v1113 = vsel %vm555, %v512, 0
        %v1116 = vsel %vm555, %v513, 0
        %v1119 = vsel %vm555, %v514, 0
        %v1122 = vsel %vm555, %v515, 0
        %v1125 = vsel %vm555, %v516, 0
        %v1128 = vsel %vm555, %v517, 0
        %v1131 = vsel %vm555, %v518, 0
        %1133 = vmatprep.subr.mxu0 0.0
        %1134 = vmatpush1.msra.mxu0 %v469
        %1135 = vmatprep.subr.mxu0 0.0
        %1136 = vmatpush1.msra.mxu0 %v474
        %1137 = vmatprep.subr.mxu0 0.0
        %1138 = vmatpush1.msra.mxu0 %v479
        %1139 = vmatprep.subr.mxu0 0.0
        %1140 = vmatpush1.msra.mxu0 %v484
        %1141 = vmatprep.subr.mxu0 0.0
        %1142 = vmatpush1.msra.mxu0 0.0
        %1143 = vmatprep.subr.mxu0 0.0
        %1144 = vmatpush1.msra.mxu0 0.0
        %1145 = vmatprep.subr.mxu0 0.0
        %1146 = vmatpush1.msra.mxu0 0.0
        %1147 = vmatprep.subr.mxu0 0.0
        %1148 = vmatpush1.msra.mxu0 0.0
        %1149 = vmatprep.subr.mxu0 0.0
        %1150 = vmatpush1.msra.mxu0 0.0
        %1151 = vmatprep.subr.mxu0 0.0
        %1152 = vmatpush1.msra.mxu0 0.0
        %1153 = vmatprep.subr.mxu0 0.0
        %1154 = vmatpush1.msra.mxu0 0.0
        %1155 = vmatprep.subr.mxu0 0.0
        %1156 = vmatpush1.msra.mxu0 0.0
        %1157 = vmatprep.subr.mxu0 0.0
        %1158 = vmatpush1.msra.mxu0 0.0
        %1159 = vmatprep.subr.mxu0 0.0
        %1160 = vmatpush1.msra.mxu0 0.0
        %1161 = vmatprep.subr.mxu0 0.0
        %1162 = vmatpush1.msra.mxu0 0.0
        %1163 = vmatprep.subr.mxu0 0.0
        %1164 = vmatpush1.msra.mxu0 0.0
        %1165 = vmatprep.subr.mxu0 0.0
        %1166 = vmatpush1.msra.mxu0 0.0
        %1167 = vmatprep.subr.mxu0 0.0
        %1168 = vmatpush1.msra.mxu0 0.0
        %1169 = vmatprep.subr.mxu0 0.0
        %1170 = vmatpush1.msra.mxu0 0.0
        %1171 = vmatprep.subr.mxu0 0.0
        %1172 = vmatpush1.msra.mxu0 0.0
        %1173 = vmatprep.subr.mxu0 0.0
        %1174 = vmatpush1.msra.mxu0 0.0
        %1175 = vmatprep.subr.mxu0 0.0
        %1176 = vmatpush1.msra.mxu0 0.0
        %1177 = vmatprep.subr.mxu0 0.0
        %1178 = vmatpush1.msra.mxu0 0.0
        %1179 = vmatprep.subr.mxu0 0.0
        %1180 = vmatpush1.msra.mxu0 0.0
        %1181 = vmatprep.subr.mxu0 0.0
        %1182 = vmatpush1.msra.mxu0 0.0
        %1183 = vmatprep.subr.mxu0 0.0
        %1184 = vmatpush1.msra.mxu0 0.0
        %1185 = vmatprep.subr.mxu0 0.0
        %1186 = vmatpush1.msra.mxu0 0.0
        %1187 = vmatprep.subr.mxu0 0.0
        %1188 = vmatpush1.msra.mxu0 0.0
        %1189 = vmatprep.subr.mxu0 0.0
        %1190 = vmatpush1.msra.mxu0 0.0
        %1191 = vmatprep.subr.mxu0 0.0
        %1192 = vmatpush1.msra.mxu0 0.0
        %1193 = vmatprep.subr.mxu0 0.0
        %1194 = vmatpush1.msra.mxu0 0.0
        %1195 = vmatprep.subr.mxu0 0.0
        %1196 = vmatpush1.msra.mxu0 0.0
        %1197 = vmatprep.mubr.f32.mxu0 0.0
        %1198 = vmatmul.mubr.f32.gmra.mrb[0].mxu0 %v1038
        %v1199 = vpop.f32.mrb[0].mxu0
        %v1200 = vadd.f32 %v880, %v1199
        %v1201 = vpop.f32.mrb[0].mxu0
        %1202 = vmatprep.mubr.f32.mxu0 0.0
        %1203 = vmatmul.mubr.f32.gmra.mrb[0].mxu0 %v1041
        %v1204 = vpop.f32.mrb[0].mxu0
        %v1205 = vadd.f32 %v885, %v1204
        %v1206 = vpop.f32.mrb[0].mxu0
        %1207 = vmatprep.mubr.f32.mxu0 0.0
        %1208 = vmatmul.mubr.f32.gmra.mrb[0].mxu0 %v1044
        %v1209 = vpop.f32.mrb[0].mxu0
        %v1210 = vadd.f32 %v890, %v1209
        %v1211 = vpop.f32.mrb[0].mxu0
        %1212 = vmatprep.mubr.f32.mxu0 0.0
        %1213 = vmatmul.mubr.f32.gmra.mrb[0].mxu0 %v1047
        %v1214 = vpop.f32.mrb[0].mxu0
        %v1215 = vadd.f32 %v895, %v1214
        %v1216 = vpop.f32.mrb[0].mxu0
        %1217 = vmatprep.mubr.f32.mxu0 0.0
        %1218 = vmatmul.mubr.f32.gmra.mrb[0].mxu0 %v1050
        %v1219 = vpop.f32.mrb[0].mxu0
        %v1220 = vadd.f32 %v900, %v1219
        %v1221 = vpop.f32.mrb[0].mxu0
        %1222 = vmatprep.mubr.f32.mxu0 0.0
        %1223 = vmatmul.mubr.f32.gmra.mrb[0].mxu0 %v1053
        %v1224 = vpop.f32.mrb[0].mxu0
        %v1225 = vadd.f32 %v905, %v1224
        %v1226 = vpop.f32.mrb[0].mxu0
        %1227 = vmatprep.mubr.f32.mxu0 0.0
        %1228 = vmatmul.mubr.f32.gmra.mrb[0].mxu0 %v1056
        %v1229 = vpop.f32.mrb[0].mxu0
        %v1230 = vadd.f32 %v910, %v1229
        %v1231 = vpop.f32.mrb[0].mxu0
        %1232 = vmatprep.mubr.f32.mxu0 0.0
        %1233 = vmatmul.mubr.f32.gmra.mrb[0].mxu0 %v1059
        %v1234 = vpop.f32.mrb[0].mxu0
        %v1235 = vadd.f32 %v915, %v1234
        %v1236 = vpop.f32.mrb[0].mxu0
        %1237 = vmatprep.mubr.f32.mxu0 0.0
        %1238 = vmatmul.mubr.f32.gmra.mrb[0].mxu0 %v1062
        %v1239 = vpop.f32.mrb[0].mxu0
        %v1240 = vadd.f32 %v920, %v1239
        %v1241 = vpop.f32.mrb[0].mxu0
        %1242 = vmatprep.mubr.f32.mxu0 0.0
        %1243 = vmatmul.mubr.f32.gmra.mrb[0].mxu0 %v1065
        %v1244 = vpop.f32.mrb[0].mxu0
        %v1245 = vadd.f32 %v925, %v1244
        %v1246 = vpop.f32.mrb[0].mxu0
        %1247 = vmatprep.mubr.f32.mxu0 0.0
        %1248 = vmatmul.mubr.f32.gmra.mrb[0].mxu0 %v1068
        %v1249 = vpop.f32.mrb[0].mxu0
        %v1250 = vadd.f32 %v930, %v1249
        %v1251 = vpop.f32.mrb[0].mxu0
        %1252 = vmatprep.mubr.f32.mxu0 0.0
        %1253 = vmatmul.mubr.f32.gmra.mrb[0].mxu0 %v1071
        %v1254 = vpop.f32.mrb[0].mxu0
        %v1255 = vadd.f32 %v935, %v1254
        %v1256 = vpop.f32.mrb[0].mxu0
        %1257 = vmatprep.mubr.f32.mxu0 0.0
        %1258 = vmatmul.mubr.f32.gmra.mrb[0].mxu0 %v1074
        %v1259 = vpop.f32.mrb[0].mxu0
        %v1260 = vadd.f32 %v940, %v1259
        %v1261 = vpop.f32.mrb[0].mxu0
        %1262 = vmatprep.mubr.f32.mxu0 0.0
        %1263 = vmatmul.mubr.f32.gmra.mrb[0].mxu0 %v1077
        %v1264 = vpop.f32.mrb[0].mxu0
        %v1265 = vadd.f32 %v945, %v1264
        %v1266 = vpop.f32.mrb[0].mxu0
        %1267 = vmatprep.mubr.f32.mxu0 0.0
        %1268 = vmatmul.mubr.f32.gmra.mrb[0].mxu0 %v1080
        %v1269 = vpop.f32.mrb[0].mxu0
        %v1270 = vadd.f32 %v950, %v1269
        %v1271 = vpop.f32.mrb[0].mxu0
        %1272 = vmatprep.mubr.f32.mxu0 0.0
        %1273 = vmatmul.mubr.f32.gmra.mrb[0].mxu0 %v1083
        %v1274 = vpop.f32.mrb[0].mxu0
        %v1275 = vadd.f32 %v955, %v1274
        %v1276 = vpop.f32.mrb[0].mxu0
        %1277 = vmatprep.mubr.f32.mxu0 0.0
        %1278 = vmatmul.mubr.f32.gmra.mrb[0].mxu0 %v1086
        %v1279 = vpop.f32.mrb[0].mxu0
        %v1280 = vadd.f32 %v960, %v1279
        %v1281 = vpop.f32.mrb[0].mxu0
        %1282 = vmatprep.mubr.f32.mxu0 0.0
        %1283 = vmatmul.mubr.f32.gmra.mrb[0].mxu0 %v1089
        %v1284 = vpop.f32.mrb[0].mxu0
        %v1285 = vadd.f32 %v965, %v1284
        %v1286 = vpop.f32.mrb[0].mxu0
        %1287 = vmatprep.mubr.f32.mxu0 0.0
        %1288 = vmatmul.mubr.f32.gmra.mrb[0].mxu0 %v1092
        %v1289 = vpop.f32.mrb[0].mxu0
        %v1290 = vadd.f32 %v970, %v1289
        %v1291 = vpop.f32.mrb[0].mxu0
        %1292 = vmatprep.mubr.f32.mxu0 0.0
        %1293 = vmatmul.mubr.f32.gmra.mrb[0].mxu0 %v1095
        %v1294 = vpop.f32.mrb[0].mxu0
        %v1295 = vadd.f32 %v975, %v1294
        %v1296 = vpop.f32.mrb[0].mxu0
        %1297 = vmatprep.mubr.f32.mxu0 0.0
        %1298 = vmatmul.mubr.f32.gmra.mrb[0].mxu0 %v1098
        %v1299 = vpop.f32.mrb[0].mxu0
        %v1300 = vadd.f32 %v980, %v1299
        %v1301 = vpop.f32.mrb[0].mxu0
        %1302 = vmatprep.mubr.f32.mxu0 0.0
        %1303 = vmatmul.mubr.f32.gmra.mrb[0].mxu0 %v1101
        %v1304 = vpop.f32.mrb[0].mxu0
        %v1305 = vadd.f32 %v985, %v1304
        %v1306 = vpop.f32.mrb[0].mxu0
        %1307 = vmatprep.mubr.f32.mxu0 0.0
        %1308 = vmatmul.mubr.f32.gmra.mrb[0].mxu0 %v1104
        %v1309 = vpop.f32.mrb[0].mxu0
        %v1310 = vadd.f32 %v990, %v1309
        %v1311 = vpop.f32.mrb[0].mxu0
        %1312 = vmatprep.mubr.f32.mxu0 0.0
        %1313 = vmatmul.mubr.f32.gmra.mrb[0].mxu0 %v1107
        %v1314 = vpop.f32.mrb[0].mxu0
        %v1315 = vadd.f32 %v995, %v1314
        %v1316 = vpop.f32.mrb[0].mxu0
        %1317 = vmatprep.mubr.f32.mxu0 0.0
        %1318 = vmatmul.mubr.f32.gmra.mrb[0].mxu0 %v1110
        %v1319 = vpop.f32.mrb[0].mxu0
        %v1320 = vadd.f32 %v1000, %v1319
        %v1321 = vpop.f32.mrb[0].mxu0
        %1322 = vmatprep.mubr.f32.mxu0 0.0
        %1323 = vmatmul.mubr.f32.gmra.mrb[0].mxu0 %v1113
        %v1324 = vpop.f32.mrb[0].mxu0
        %v1325 = vadd.f32 %v1005, %v1324
        %v1326 = vpop.f32.mrb[0].mxu0
        %1327 = vmatprep.mubr.f32.mxu0 0.0
        %1328 = vmatmul.mubr.f32.gmra.mrb[0].mxu0 %v1116
        %v1329 = vpop.f32.mrb[0].mxu0
        %v1330 = vadd.f32 %v1010, %v1329
        %v1331 = vpop.f32.mrb[0].mxu0
        %1332 = vmatprep.mubr.f32.mxu0 0.0
        %1333 = vmatmul.mubr.f32.gmra.mrb[0].mxu0 %v1119
        %v1334 = vpop.f32.mrb[0].mxu0
        %v1335 = vadd.f32 %v1015, %v1334
        %v1336 = vpop.f32.mrb[0].mxu0
        %1337 = vmatprep.mubr.f32.mxu0 0.0
        %1338 = vmatmul.mubr.f32.gmra.mrb[0].mxu0 %v1122
        %v1339 = vpop.f32.mrb[0].mxu0
        %v1340 = vadd.f32 %v1020, %v1339
        %v1341 = vpop.f32.mrb[0].mxu0
        %1342 = vmatprep.mubr.f32.mxu0 0.0
        %1343 = vmatmul.mubr.f32.gmra.mrb[0].mxu0 %v1125
        %v1344 = vpop.f32.mrb[0].mxu0
        %v1345 = vadd.f32 %v1025, %v1344
        %v1346 = vpop.f32.mrb[0].mxu0
        %1347 = vmatprep.mubr.f32.mxu0 0.0
        %1348 = vmatmul.mubr.f32.gmra.mrb[0].mxu0 %v1128
        %v1349 = vpop.f32.mrb[0].mxu0
        %v1350 = vadd.f32 %v1030, %v1349
        %v1351 = vpop.f32.mrb[0].mxu0
        %1352 = vmatprep.mubr.f32.mxu0 0.0
        %1353 = vmatmul.mubr.f32.gmra.mrb[0].mxu0 %v1131
        %v1354 = vpop.f32.mrb[0].mxu0
        %v1355 = vadd.f32 %v1035, %v1354
        %v1356 = vpop.f32.mrb[0].mxu0
        %1357 = vdwg.mxu0
        %v1358 = vld [vmem:[%s6] sm:$0xff]
        %v1359 = vld [vmem:[%s6 + $0x8] sm:$0xff]
        %v1360 = vld [vmem:[%s6 + $0x10] sm:$0xff]
        %v1361 = vld [vmem:[%s6 + $0x18] sm:$0xff]
        %v1362 = vld [vmem:[%s6 + $0x20] sm:$0xff]
        %v1363 = vld [vmem:[%s6 + $0x28] sm:$0xff]
        %v1364 = vld [vmem:[%s6 + $0x30] sm:$0xff]
        %v1365 = vld [vmem:[%s6 + $0x38] sm:$0xff]
        %v1366 = vld [vmem:[%s6 + $0x40] sm:$0xff]
        %v1367 = vld [vmem:[%s6 + $0x48] sm:$0xff]
        %v1368 = vld [vmem:[%s6 + $0x50] sm:$0xff]
        %v1369 = vld [vmem:[%s6 + $0x58] sm:$0xff]
        %v1370 = vld [vmem:[%s6 + $0x60] sm:$0xff]
        %v1371 = vld [vmem:[%s6 + $0x68] sm:$0xff]
        %v1372 = vld [vmem:[%s6 + $0x70] sm:$0xff]
        %v1373 = vld [vmem:[%s6 + $0x78] sm:$0xff]
        %v1374 = vld [vmem:[%s6 + $0x80] sm:$0xff]
        %v1375 = vld [vmem:[%s6 + $0x88] sm:$0xff]
        %v1376 = vld [vmem:[%s6 + $0x90] sm:$0xff]
        %v1377 = vld [vmem:[%s6 + $0x98] sm:$0xff]
        %v1378 = vld [vmem:[%s6 + $0xa0] sm:$0xff]
        %v1379 = vld [vmem:[%s6 + $0xa8] sm:$0xff]
        %v1380 = vld [vmem:[%s6 + $0xb0] sm:$0xff]
        %v1381 = vld [vmem:[%s6 + $0xb8] sm:$0xff]
        %v1382 = vld [vmem:[%s6 + $0xc0] sm:$0xff]
        %v1383 = vld [vmem:[%s6 + $0xc8] sm:$0xff]
        %v1384 = vld [vmem:[%s6 + $0xd0] sm:$0xff]
        %v1385 = vld [vmem:[%s6 + $0xd8] sm:$0xff]
        %v1386 = vld [vmem:[%s6 + $0xe0] sm:$0xff]
        %v1387 = vld [vmem:[%s6 + $0xe8] sm:$0xff]
        %v1388 = vld [vmem:[%s6 + $0xf0] sm:$0xff]
        %v1389 = vld [vmem:[%s6 + $0xf8] sm:$0xff]
        %1391 = vset.pattern.permute.xlu0 0
        %1392 = vperm.xlu0 %1391, %v1358
        %v1393 = vpop.permute.xlu0 %1392
        %1396 = vset.pattern.permute.xlu0 0
        %1397 = vperm.xlu0 %1396, %v1359
        %v1398 = vpop.permute.xlu0 %1397
        %1401 = vset.pattern.permute.xlu0 0
        %1402 = vperm.xlu0 %1401, %v1360
        %v1403 = vpop.permute.xlu0 %1402
        %1406 = vset.pattern.permute.xlu0 0
        %1407 = vperm.xlu0 %1406, %v1361
        %v1408 = vpop.permute.xlu0 %1407
        %1411 = vset.pattern.permute.xlu0 0
        %1412 = vperm.xlu0 %1411, %v1362
        %v1413 = vpop.permute.xlu0 %1412
        %1416 = vset.pattern.permute.xlu0 0
        %1417 = vperm.xlu0 %1416, %v1363
        %v1418 = vpop.permute.xlu0 %1417
        %1421 = vset.pattern.permute.xlu0 0
        %1422 = vperm.xlu0 %1421, %v1364
        %v1423 = vpop.permute.xlu0 %1422
        %1426 = vset.pattern.permute.xlu0 0
        %1427 = vperm.xlu0 %1426, %v1365
        %v1428 = vpop.permute.xlu0 %1427
        %1431 = vset.pattern.permute.xlu0 0
        %1432 = vperm.xlu0 %1431, %v1366
        %v1433 = vpop.permute.xlu0 %1432
        %1436 = vset.pattern.permute.xlu0 0
        %1437 = vperm.xlu0 %1436, %v1367
        %v1438 = vpop.permute.xlu0 %1437
        %1441 = vset.pattern.permute.xlu0 0
        %1442 = vperm.xlu0 %1441, %v1368
        %v1443 = vpop.permute.xlu0 %1442
        %1446 = vset.pattern.permute.xlu0 0
        %1447 = vperm.xlu0 %1446, %v1369
        %v1448 = vpop.permute.xlu0 %1447
        %1451 = vset.pattern.permute.xlu0 0
        %1452 = vperm.xlu0 %1451, %v1370
        %v1453 = vpop.permute.xlu0 %1452
        %1456 = vset.pattern.permute.xlu0 0
        %1457 = vperm.xlu0 %1456, %v1371
        %v1458 = vpop.permute.xlu0 %1457
        %1461 = vset.pattern.permute.xlu0 0
        %1462 = vperm.xlu0 %1461, %v1372
        %v1463 = vpop.permute.xlu0 %1462
        %1466 = vset.pattern.permute.xlu0 0
        %1467 = vperm.xlu0 %1466, %v1373
        %v1468 = vpop.permute.xlu0 %1467
        %1471 = vset.pattern.permute.xlu0 0
        %1472 = vperm.xlu0 %1471, %v1374
        %v1473 = vpop.permute.xlu0 %1472
        %1476 = vset.pattern.permute.xlu0 0
        %1477 = vperm.xlu0 %1476, %v1375
        %v1478 = vpop.permute.xlu0 %1477
        %1481 = vset.pattern.permute.xlu0 0
        %1482 = vperm.xlu0 %1481, %v1376
        %v1483 = vpop.permute.xlu0 %1482
        %1486 = vset.pattern.permute.xlu0 0
        %1487 = vperm.xlu0 %1486, %v1377
        %v1488 = vpop.permute.xlu0 %1487
        %1491 = vset.pattern.permute.xlu0 0
        %1492 = vperm.xlu0 %1491, %v1378
        %v1493 = vpop.permute.xlu0 %1492
        %1496 = vset.pattern.permute.xlu0 0
        %1497 = vperm.xlu0 %1496, %v1379
        %v1498 = vpop.permute.xlu0 %1497
        %1501 = vset.pattern.permute.xlu0 0
        %1502 = vperm.xlu0 %1501, %v1380
        %v1503 = vpop.permute.xlu0 %1502
        %1506 = vset.pattern.permute.xlu0 0
        %1507 = vperm.xlu0 %1506, %v1381
        %v1508 = vpop.permute.xlu0 %1507
        %1511 = vset.pattern.permute.xlu0 0
        %1512 = vperm.xlu0 %1511, %v1382
        %v1513 = vpop.permute.xlu0 %1512
        %1516 = vset.pattern.permute.xlu0 0
        %1517 = vperm.xlu0 %1516, %v1383
        %v1518 = vpop.permute.xlu0 %1517
        %1521 = vset.pattern.permute.xlu0 0
        %1522 = vperm.xlu0 %1521, %v1384
        %v1523 = vpop.permute.xlu0 %1522
        %1526 = vset.pattern.permute.xlu0 0
        %1527 = vperm.xlu0 %1526, %v1385
        %v1528 = vpop.permute.xlu0 %1527
        %1531 = vset.pattern.permute.xlu0 0
        %1532 = vperm.xlu0 %1531, %v1386
        %v1533 = vpop.permute.xlu0 %1532
        %1536 = vset.pattern.permute.xlu0 0
        %1537 = vperm.xlu0 %1536, %v1387
        %v1538 = vpop.permute.xlu0 %1537
        %1541 = vset.pattern.permute.xlu0 0
        %1542 = vperm.xlu0 %1541, %v1388
        %v1543 = vpop.permute.xlu0 %1542
        %1546 = vset.pattern.permute.xlu0 0
        %1547 = vperm.xlu0 %1546, %v1389
        %v1548 = vpop.permute.xlu0 %1547
        %v1550 = vadd.f32 %v1200, %v1393
        %v1551 = vadd.f32 %v1205, %v1398
        %v1552 = vadd.f32 %v1210, %v1403
        %v1553 = vadd.f32 %v1215, %v1408
        %v1554 = vadd.f32 %v1220, %v1413
        %v1555 = vadd.f32 %v1225, %v1418
        %v1556 = vadd.f32 %v1230, %v1423
        %v1557 = vadd.f32 %v1235, %v1428
        %v1558 = vadd.f32 %v1240, %v1433
        %v1559 = vadd.f32 %v1245, %v1438
        %v1560 = vadd.f32 %v1250, %v1443
        %v1561 = vadd.f32 %v1255, %v1448
        %v1562 = vadd.f32 %v1260, %v1453
        %v1563 = vadd.f32 %v1265, %v1458
        %v1564 = vadd.f32 %v1270, %v1463
        %v1565 = vadd.f32 %v1275, %v1468
        %v1566 = vadd.f32 %v1280, %v1473
        %v1567 = vadd.f32 %v1285, %v1478
        %v1568 = vadd.f32 %v1290, %v1483
        %v1569 = vadd.f32 %v1295, %v1488
        %v1570 = vadd.f32 %v1300, %v1493
        %v1571 = vadd.f32 %v1305, %v1498
        %v1572 = vadd.f32 %v1310, %v1503
        %v1573 = vadd.f32 %v1315, %v1508
        %v1574 = vadd.f32 %v1320, %v1513
        %v1575 = vadd.f32 %v1325, %v1518
        %v1576 = vadd.f32 %v1330, %v1523
        %v1577 = vadd.f32 %v1335, %v1528
        %v1578 = vadd.f32 %v1340, %v1533
        %v1579 = vadd.f32 %v1345, %v1538
        %v1580 = vadd.f32 %v1350, %v1543
        %v1581 = vadd.f32 %v1355, %v1548
        %v1582 = vmax.f32 %v1550, 0.0
        %v1583 = vmax.f32 %v1551, 0.0
        %v1584 = vmax.f32 %v1552, 0.0
        %v1585 = vmax.f32 %v1553, 0.0
        %v1586 = vmax.f32 %v1554, 0.0
        %v1587 = vmax.f32 %v1555, 0.0
        %v1588 = vmax.f32 %v1556, 0.0
        %v1589 = vmax.f32 %v1557, 0.0
        %v1590 = vmax.f32 %v1558, 0.0
        %v1591 = vmax.f32 %v1559, 0.0
        %v1592 = vmax.f32 %v1560, 0.0
        %v1593 = vmax.f32 %v1561, 0.0
        %v1594 = vmax.f32 %v1562, 0.0
        %v1595 = vmax.f32 %v1563, 0.0
        %v1596 = vmax.f32 %v1564, 0.0
        %v1597 = vmax.f32 %v1565, 0.0
        %v1598 = vmax.f32 %v1566, 0.0
        %v1599 = vmax.f32 %v1567, 0.0
        %v1600 = vmax.f32 %v1568, 0.0
        %v1601 = vmax.f32 %v1569, 0.0
        %v1602 = vmax.f32 %v1570, 0.0
        %v1603 = vmax.f32 %v1571, 0.0
        %v1604 = vmax.f32 %v1572, 0.0
        %v1605 = vmax.f32 %v1573, 0.0
        %v1606 = vmax.f32 %v1574, 0.0
        %v1607 = vmax.f32 %v1575, 0.0
        %v1608 = vmax.f32 %v1576, 0.0
        %v1609 = vmax.f32 %v1577, 0.0
        %v1610 = vmax.f32 %v1578, 0.0
        %v1611 = vmax.f32 %v1579, 0.0
        %v1612 = vmax.f32 %v1580, 0.0
        %v1613 = vmax.f32 %v1581, 0.0
        %v1614 = vld [vmem:[%s7] sm:$0x3]
        %v1615 = vld [vmem:[#allocation3] sm:$0x1]
        %1617 = vset.pattern.permute.xlu0 0
        %1618 = vperm.xlu0 %1617, %v1615
        %v1619 = vpop.permute.xlu0 %1618
        %v1621 = vlaneseq
        %v1622 = vshrl.u32 %v1621, 7
        %v1623 = vsub.s32 0, %v1622
        %v1624 = vrot.slane %v1619, %v1623
        %v1626 = vlaneseq
        %v1627 = vshrl.u32 %v1626, 7
        %v1628 = vsub.s32 0, %v1627
        %v1629 = vrot.slane %v1614, %v1628
        %v1630 = vlaneseq
        %v1631 = vshrl.u32 %v1630, 7
        %v1632 = vsub.s32 1, %v1631
        %v1633 = vrot.slane %v1614, %v1632
        %1636 = vmatprep.subr.mxu0 0.0
        %1637 = vmatpush1.msra.mxu0 %v1582
        %1638 = vmatprep.subr.mxu0 0.0
        %1639 = vmatpush1.msra.mxu0 %v1583
        %1640 = vmatprep.subr.mxu0 0.0
        %1641 = vmatpush1.msra.mxu0 %v1584
        %1642 = vmatprep.subr.mxu0 0.0
        %1643 = vmatpush1.msra.mxu0 %v1585
        %1644 = vmatprep.subr.mxu0 0.0
        %1645 = vmatpush1.msra.mxu0 %v1586
        %1646 = vmatprep.subr.mxu0 0.0
        %1647 = vmatpush1.msra.mxu0 %v1587
        %1648 = vmatprep.subr.mxu0 0.0
        %1649 = vmatpush1.msra.mxu0 %v1588
        %1650 = vmatprep.subr.mxu0 0.0
        %1651 = vmatpush1.msra.mxu0 %v1589
        %1652 = vmatprep.subr.mxu0 0.0
        %1653 = vmatpush1.msra.mxu0 %v1590
        %1654 = vmatprep.subr.mxu0 0.0
        %1655 = vmatpush1.msra.mxu0 %v1591
        %1656 = vmatprep.subr.mxu0 0.0
        %1657 = vmatpush1.msra.mxu0 %v1592
        %1658 = vmatprep.subr.mxu0 0.0
        %1659 = vmatpush1.msra.mxu0 %v1593
        %1660 = vmatprep.subr.mxu0 0.0
        %1661 = vmatpush1.msra.mxu0 %v1594
        %1662 = vmatprep.subr.mxu0 0.0
        %1663 = vmatpush1.msra.mxu0 %v1595
        %1664 = vmatprep.subr.mxu0 0.0
        %1665 = vmatpush1.msra.mxu0 %v1596
        %1666 = vmatprep.subr.mxu0 0.0
        %1667 = vmatpush1.msra.mxu0 %v1597
        %1668 = vmatprep.subr.mxu0 0.0
        %1669 = vmatpush1.msra.mxu0 %v1598
        %1670 = vmatprep.subr.mxu0 0.0
        %1671 = vmatpush1.msra.mxu0 %v1599
        %1672 = vmatprep.subr.mxu0 0.0
        %1673 = vmatpush1.msra.mxu0 %v1600
        %1674 = vmatprep.subr.mxu0 0.0
        %1675 = vmatpush1.msra.mxu0 %v1601
        %1676 = vmatprep.subr.mxu0 0.0
        %1677 = vmatpush1.msra.mxu0 %v1602
        %1678 = vmatprep.subr.mxu0 0.0
        %1679 = vmatpush1.msra.mxu0 %v1603
        %1680 = vmatprep.subr.mxu0 0.0
        %1681 = vmatpush1.msra.mxu0 %v1604
        %1682 = vmatprep.subr.mxu0 0.0
        %1683 = vmatpush1.msra.mxu0 %v1605
        %1684 = vmatprep.subr.mxu0 0.0
        %1685 = vmatpush1.msra.mxu0 %v1606
        %1686 = vmatprep.subr.mxu0 0.0
        %1687 = vmatpush1.msra.mxu0 %v1607
        %1688 = vmatprep.subr.mxu0 0.0
        %1689 = vmatpush1.msra.mxu0 %v1608
        %1690 = vmatprep.subr.mxu0 0.0
        %1691 = vmatpush1.msra.mxu0 %v1609
        %1692 = vmatprep.subr.mxu0 0.0
        %1693 = vmatpush1.msra.mxu0 %v1610
        %1694 = vmatprep.subr.mxu0 0.0
        %1695 = vmatpush1.msra.mxu0 %v1611
        %1696 = vmatprep.subr.mxu0 0.0
        %1697 = vmatpush1.msra.mxu0 %v1612
        %1698 = vmatprep.subr.mxu0 0.0
        %1699 = vmatpush1.msra.mxu0 %v1613
        %1700 = vmatprep.mubr.f32.mxu0 %v1633
        %1701 = vmatmul.mubr.f32.gmra.mrb[0].mxu0 %v1629
        %v1702 = vpop.f32.mrb[0].mxu0
        %v1703 = vadd.f32 %v1624, %v1702
        %v1704 = vpop.f32.mrb[0].mxu0
        %1705 = vdwg.mxu0
        %vm1706 = vcmask 16384
        %1707 = vst.msk [vmem:[%s326] sm:$0x1] %vm1706, %v1703
        %v1708 = vlaneseq
        %v1709 = vand.u32 %v1708, 127
        %v1710 = vcvt.s32.f32 %v1709
        %v1711 = vsel %vm1706, %v1703, -inf
        %1712 = vmax.xlane.f32.xlu0 %v1711
        %v1713 = vpop.xlane.xlu0 %1712
        %vm1714 = vcmp.ge.f32.partialorder %v1703, %v1713
        %v1715 = vsel %vm1714, %v1710, 3.0
        %v1716 = vsel %vm1706, %v1715, inf
        %1717 = vmin.xlane.f32.xlu0 %v1716
        %v1718 = vpop.xlane.xlu0 %1717
        %vm1719 = vcmp.eq.f32.partialorder %v1710, %v1718
        %v1720 = vsel %vm1719, 1, 0
        %v1721 = vcvt.s32.f32 %v1720
        %v1722 = vlaneseq
        %v1723 = vshrl.u32 %v1722, 7
        %v1724 = vsub.s32 0, %v1723
        %v1725 = vrot.slane %v1721, %v1724
        %v1726 = vmul.f32 %v469, %v1725
        %v1727 = vmul.f32 %v474, %v1725
        %v1728 = vmul.f32 %v479, %v1725
        %v1729 = vmul.f32 %v484, %v1725
        %vm1730 = vcmask 23552
        %v1731 = vsel %vm1730, %v1726, 0.0
        %1732 = vadd.xlane.f32.xlu0 %v1731
        %v1733 = vpop.xlane.xlu0 %1732
        %v1734 = vsel %vm1730, %v1727, 0.0
        %1735 = vadd.xlane.f32.xlu0 %v1734
        %v1736 = vpop.xlane.xlu0 %1735
        %v1737 = vsel %vm1730, %v1728, 0.0
        %1738 = vadd.xlane.f32.xlu0 %v1737
        %v1739 = vpop.xlane.xlu0 %1738
        %v1740 = vsel %vm1730, %v1729, 0.0
        %1741 = vadd.xlane.f32.xlu0 %v1740
        %v1742 = vpop.xlane.xlu0 %1741
        %vm1743 = vcmask 7168
        %1744 = vst.msk [vmem:[#allocation2] sm:$0xff] %vm1743, %v1733
        %1745 = vst.msk [vmem:[#allocation2 + $0x8] sm:$0xff] %vm1743, %v1736
        %1746 = vst.msk [vmem:[#allocation2 + $0x10] sm:$0xff] %vm1743, %v1739
        %1747 = vst.msk [vmem:[#allocation2 + $0x18] sm:$0xff] %vm1743, %v1742
        %s1748 = sand.u32 %s227, 1
        %s1749 = scalar_lea.sflag [#allocation5], %s1748
        %s1750 = sand.u32 %s227, 1
        %s1751 = scalar_lea.vmem [#allocation4], %s1750
        // Predicated region
        $region61: #{episode_forward.7} parent=55 // pred_check
          %p1752 = pneg %p237
        $region62: #{episode_forward.7} parent=55 // pred_check_branch
          %1754 = sbr.rel (%p1752) target = $region64
        $region63: #{episode_forward.7} parent=55 // pred_region
          %s1756 = ssub.s32 16, 16
          %1757 = vsyncadd %s1749, %s1756
          %s1758 = smul.addr %s25, 16
          %s1759 = scalar_lea.hbm %s9, %s1758
          %s1761 = sshll.u32 %s1751, 4
          %s1762 = int_to_ptr.vmem [resolvable:$true] %s1761
          %1764 = dma.vmem_to_hbm [thread:$0]  %s1762, 16, %s1759, %s1749
        $region64: #{episode_forward.7} parent=55 // pred_fallthru
          _
      $region56: #{episode_forward.7} parent=5 // pred_fallthru
        _
      %p1765 = scmp.le.s32.totalorder 2, %s20
      // Predicated region
      $region65: #{episode_forward.7} parent=5 // pred_check
        %p1766 = pneg %p1765
      $region66: #{episode_forward.7} parent=5 // pred_check_branch
        %1768 = sbr.rel (%p1766) target = $region68
      $region67: #{episode_forward.7} parent=5 // pred_region
        %s1769 = ssub.s32 %s20, 2
        // Predicated region
        $region69: #{episode_forward.7} parent=67 // pred_check
          %p1770 = pneg %p243
        $region70: #{episode_forward.7} parent=67 // pred_check_branch
          %1772 = sbr.rel (%p1770) target = $region72
        $region71: #{episode_forward.7} parent=67 // pred_region
          %s1773 = sand.u32 %s228, 1
          %s1774 = scalar_lea.sflag [#allocation5], %s1773
          %s1775 = sand.u32 %s228, 1
          %s1776 = scalar_lea.vmem [#allocation4], %s1775
          %1777 = dma.done %s1774, 16
        $region72: #{episode_forward.7} parent=67 // pred_fallthru
          _
      $region68: #{episode_forward.7} parent=5 // pred_fallthru
        _
    $region6: #{episode_forward.7} parent=1 // loop_footer
      %s24 = sadd.s32 1, %s20
    $region7: #{episode_forward.7} parent=1 // loop_footer_branch
      %19 = sbr.rel target = $region3
    $region8: #{episode_forward.7} parent=1 // loop_exit
      _
    %1778 = vsyncpa [#allocation5], 1
    %s1779 = scalar_lea.sflag [#allocation5], 1
    %1780 = vsyncpa %s1779, 1

</llo_original>
